<compile_context>
chip_gen: v7x
topology: tpu7x:2x2x1
jax: 0.10.0
libtpu: 0.0.40
codegen_flags: <defaults>
</compile_context>

<pallas_src>
import functools

import jax
import jax.numpy as jnp
import numpy as np
from jax import lax
from jax.experimental import pallas as pl
from jax.experimental.pallas import tpu as pltpu

# Deterministic f32 accumulation on the MXU regardless of global precision config.
_MXU_PRECISION = lax.Precision.HIGHEST

_SUBLANE_PACK = {4: 8, 2: 16, 1: 32}   # f32 / bf16 / int8-fp8 sublane packing


# ---------------------------------------------------------------------------
# Kernel bodies
# ---------------------------------------------------------------------------

def _toeplitz_kernel(x_ref, w_ref, pb_ref, o_ref):
    """Small-T path: one lane-dense MXU matmul per grid step.

    x_ref:  (bt, T*C_in)        flattened input rows (free HBM bitcast)
    w_ref:  (T*C_in, T*C_out)   banded conv weight (grid-invariant, VMEM-resident)
    pb_ref: (1, T*C_out)        pos_embedding[:T] + bias, flattened
    o_ref:  (bt, T*C_out)       lane-dense output slab (unmasked vst)
    """
    y = jnp.dot(x_ref[...], w_ref[...],
                preferred_element_type=jnp.float32,
                precision=_MXU_PRECISION)
    o_ref[...] = (y + pb_ref[...]).astype(o_ref.dtype)


def _im2col_kernel(x_ref, w_ref, pb_ref, o_ref, xpad_ref, *,
                   T, K, pad, halo, k_tap):
    """Large-T fallback: 'same' halo lives in a small per-core VMEM scratch.

    x_ref:    (bt, T, C_in)
    w_ref:    (K*C_in, C_out)            tap-major repacked conv weight
    pb_ref:   (T, C_out)                 pos_embedding[:T] + bias
    o_ref:    (bt, T, C_out)
    xpad_ref: (bt, halo + T + pad, C_in) zero-haloed scratch
    """
    bt, _, c_in = x_ref.shape
    c_out = o_ref.shape[-1]

    # Halo-only zeroing: the middle rows are fully overwritten by x every step,
    # so only the halo zeros need re-establishing (saves vector-store traffic
    # on the scarcest slot vs. zeroing the whole slab).
    xpad_ref[:, :halo, :] = jnp.zeros((bt, halo, c_in), xpad_ref.dtype)
    xpad_ref[:, halo + T:halo + T + pad, :] = jnp.zeros((bt, pad, c_in),
                                                        xpad_ref.dtype)
    xpad_ref[:, halo:halo + T, :] = x_ref[...]

    off = halo - pad
    if k_tap:
        # v7x: the MXU result buffer (MRB) accumulates in place, so K small
        # accumulating dots beat the narrow-lane im2col concat.
        acc = jnp.zeros((bt * T, c_out), jnp.float32)
        for k in range(K):
            lhs_k = xpad_ref[:, off + k: off + k + T, :].reshape(bt * T, c_in)
            acc = acc + jnp.dot(lhs_k, w_ref[k * c_in:(k + 1) * c_in, :],
                                preferred_element_type=jnp.float32,
                                precision=_MXU_PRECISION)
        y = acc
    else:
        # v5e/v6e: single dense matmul (avoids K MRF pops + VPU accumulates).
        cols = jnp.concatenate(
            [xpad_ref[:, off + k: off + k + T, :] for k in range(K)], axis=-1)
        y = jnp.dot(cols.reshape(bt * T, K * c_in), w_ref[...],
                    preferred_element_type=jnp.float32,
                    precision=_MXU_PRECISION)

    y = y.reshape(bt, T, c_out) + pb_ref[...][None]
    o_ref[...] = y.astype(o_ref.dtype)


# ---------------------------------------------------------------------------
# Parameter packing (run ONCE at parameter-init time; hoisted out of forward)
# ---------------------------------------------------------------------------

def _pack_toeplitz_weight(weight, T):
    """(C_out, C_in, K) -> banded (T*C_in, T*C_out).

    W[t_in*C_in + i, t_out*C_out + o] = weight[o, i, t_in - t_out + pad]
    (zero outside the K-wide band), so x.reshape(B, T*C_in) @ W is exactly the
    'same'-padded cross-correlation -- the zero padding is implicit.
    """
    C_out, C_in, K = weight.shape
    pad = K // 2
    t = jnp.arange(T)
    k_idx = t[:, None] - t[None, :] + pad                # (t_in, t_out)
    valid = (k_idx >= 0) & (k_idx < K)
    k_safe = jnp.clip(k_idx, 0, K - 1)
    w_kio = jnp.transpose(weight, (2, 1, 0))              # (K, C_in, C_out)
    w_band = jnp.where(valid[:, :, None, None], w_kio[k_safe], 0.0)
    return jnp.transpose(w_band, (0, 2, 1, 3)).reshape(T * C_in, T * C_out)


def _pack_im2col_weight(weight):
    """(C_out, C_in, K) -> (K*C_in, C_out), tap-major / c_in-minor rows."""
    w_kio = jnp.transpose(weight, (2, 1, 0))
    K, C_in, C_out = w_kio.shape
    return w_kio.reshape(K * C_in, C_out)


def conv_embedding_init(weight, bias, pos_embedding, time_steps, *, mode=None,
                        max_toeplitz_lanes=2048,
                        max_toeplitz_weight_bytes=4 * 1024 * 1024):
    """Pack ConvEmbedding parameters for the Pallas forward.

    Call once per (parameter set, time_steps); the forward then pays no
    per-call weight repack / pos+bias pre-combine.
    """
    C_out, C_in, K = weight.shape
    T = int(time_steps)
    assert K % 2 == 1, "even kernel_size would need asymmetric 'same' padding"
    assert T <= pos_embedding.shape[0], "time_steps exceeds maxlen"
    pos_bias = pos_embedding[:T] + bias[None, :]           # (T, C_out)

    if mode is None:
        w_bytes = (T * C_in) * (T * C_out) * jnp.dtype(weight.dtype).itemsize
        mode = ("toeplitz"
                if (T * C_out <= max_toeplitz_lanes
                    and w_bytes <= max_toeplitz_weight_bytes)
                else "im2col")

    if mode == "toeplitz":
        w = _pack_toeplitz_weight(weight, T)
        pb = pos_bias.reshape(1, T * C_out)
    elif mode == "im2col":
        w = _pack_im2col_weight(weight)
        pb = pos_bias
    else:
        raise ValueError(f"unknown mode {mode!r}")
    return dict(mode=mode, w=w, pb=pb, T=T, C_in=C_in, C_out=C_out, K=K)


# ---------------------------------------------------------------------------
# Block-batch selection & VMEM budgeting
# ---------------------------------------------------------------------------

def _divisors_desc(n):
    return [d for d in range(n, 0, -1) if n % d == 0]


def _vmem_limit_bytes(step_bytes):
    # Leave the default scoped limit alone for small steps; otherwise raise it
    # just enough (capped at 48 MiB -- v7x has only 64 MiB physical VMEM).
    if step_bytes <= 24 * 1024 * 1024:
        return None
    return min(int(step_bytes * 1.25) + (4 << 20), 48 * 1024 * 1024)


def _pick_bt_toeplitz(B, T, C_in, C_out, itemsize, block_batch=None,
                      vmem_cap=40 * 1024 * 1024):
    w_bytes = 2 * (T * C_in) * (T * C_out) * 4           # weight (double-buffered)

    def step_bytes(bt):
        return (2 * bt * T * C_in * itemsize              # input (double-buffered)
                + 2 * bt * T * C_out * itemsize           # output (double-buffered)
                + bt * T * C_out * 4                      # f32 matmul result
                + w_bytes)

    if block_batch is not None:
        return block_batch, step_bytes(block_batch)

    # 2-D blocks -> a sub-full batch tile must be a multiple of 8 sublanes.
    legal = [d for d in _divisors_desc(B) if d == B or d % 8 == 0]
    cands = [d for d in legal if step_bytes(d) <= vmem_cap] or [min(legal)]
    bt = cands[0]
    # Keep >=2 grid steps on bigger batches so both v7x TensorCores get work.
    if bt == B and B >= 16:
        smaller = [d for d in cands if 8 <= d <= B // 2]
        if smaller:
            bt = smaller[0]
    return bt, step_bytes(bt)


def _pick_bt_im2col(B, T, C_in, C_out, K, halo, pad, itemsize, block_batch=None,
                    vmem_cap=40 * 1024 * 1024, rows_lo=512, rows_hi=2048):
    def step_bytes(bt):
        return (2 * bt * T * C_in * itemsize               # input (double-buffered)
                + 2 * bt * T * C_out * itemsize            # output (double-buffered)
                + bt * (halo + T + pad) * C_in * itemsize  # halo scratch
                + bt * T * K * C_in * itemsize             # im2col temp
                + bt * T * C_out * 4)                      # f32 matmul result

    if block_batch is not None:
        return block_batch, step_bytes(block_batch)

    divs = _divisors_desc(B)
    # Target ~512-2048 matmul rows (bt*T) per step; never collapse to bt=1
    # unless VMEM forces it.
    cands = [d for d in divs if d * T <= rows_hi and step_bytes(d) <= vmem_cap]
    if not cands:
        cands = [d for d in divs if step_bytes(d) <= vmem_cap] or [1]
    bt = cands[0]
    if bt == B and B > 1 and (B // 2) * T >= rows_lo:
        smaller = [d for d in cands if d <= B // 2]
        if smaller:
            bt = smaller[0]
    return bt, step_bytes(bt)


# ---------------------------------------------------------------------------
# Forward
# ---------------------------------------------------------------------------

def _default_k_tap():
    # Per-tap MXU accumulation is preferable on v7x (MRB accumulates in place);
    # v5e/v6e keep the single im2col matmul (avoids MRF pops + VPU adds).
    try:
        kind = jax.devices()[0].device_kind.lower()
    except Exception:
        return False
    return ("v7" in kind) or ("7x" in kind)


def _apply_toeplitz(x, params, block_batch):
    B, T, C_in = x.shape
    C_out = params["C_out"]
    w, pb = params["w"], params["pb"]
    itemsize = jnp.dtype(x.dtype).itemsize
    bt, step_bytes = _pick_bt_toeplitz(B, T, C_in, C_out, itemsize, block_batch)
    assert B % bt == 0

    x2d = x.reshape(B, T * C_in)                       # free bitcast in HBM
    out2d = pl.pallas_call(
        _toeplitz_kernel,
        out_shape=jax.ShapeDtypeStruct((B, T * C_out), x.dtype),
        grid_spec=pltpu.PrefetchScalarGridSpec(
            num_scalar_prefetch=0,
            grid=(B // bt,),
            in_specs=[
                pl.BlockSpec((bt, T * C_in), lambda b: (b, 0)),
                # Grid-invariant, VMEM-resident operands.  (For very large
                # constants, pipeline_mode=pl.Buffered(1) would drop the
                # second buffer; irrelevant at these sizes.)
                pl.BlockSpec((T * C_in, T * C_out), lambda b: (0, 0)),
                pl.BlockSpec((1, T * C_out), lambda b: (0, 0)),
            ],
            out_specs=pl.BlockSpec((bt, T * C_out), lambda b: (b, 0)),
        ),
        compiler_params=pltpu.CompilerParams(
            dimension_semantics=("parallel",),
            vmem_limit_bytes=_vmem_limit_bytes(step_bytes)),
    )(x2d, w, pb)
    return out2d.reshape(B, T, C_out)                  # free bitcast in HBM


def _apply_im2col(x, params, block_batch, k_tap):
    B, T, C_in = x.shape
    C_out, K = params["C_out"], params["K"]
    w, pb = params["w"], params["pb"]
    pad = K // 2
    itemsize = jnp.dtype(x.dtype).itemsize
    pack = _SUBLANE_PACK.get(itemsize, 8)
    halo = pl.cdiv(pad, pack) * pack     # sublane-aligned x store in the scratch
    if k_tap is None:
        k_tap = _default_k_tap()
    # TODO(synk): pad ragged T (not a multiple of 8) in the wrapper so the
    # in-kernel (bt, T, C) -> (bt*T, C) reshapes stay pure index-folding.
    bt, step_bytes = _pick_bt_im2col(B, T, C_in, C_out, K, halo, pad, itemsize,
                                     block_batch)
    assert B % bt == 0

    kernel = functools.partial(_im2col_kernel, T=T, K=K, pad=pad, halo=halo,
                               k_tap=bool(k_tap))
    return pl.pallas_call(
        kernel,
        out_shape=jax.ShapeDtypeStruct((B, T, C_out), x.dtype),
        grid_spec=pltpu.PrefetchScalarGridSpec(
            num_scalar_prefetch=0,
            grid=(B // bt,),
            in_specs=[
                pl.BlockSpec((bt, T, C_in), lambda b: (b, 0, 0)),
                pl.BlockSpec((K * C_in, C_out), lambda b: (0, 0)),   # VMEM-resident
                pl.BlockSpec((T, C_out), lambda b: (0, 0)),          # VMEM-resident
            ],
            out_specs=pl.BlockSpec((bt, T, C_out), lambda b: (b, 0, 0)),
            scratch_shapes=[pltpu.VMEM((bt, halo + T + pad, C_in), x.dtype)],
        ),
        compiler_params=pltpu.CompilerParams(
            dimension_semantics=("parallel",),
            vmem_limit_bytes=_vmem_limit_bytes(step_bytes)),
    )(x, w, pb)


def conv_embedding_apply(x, params, *, block_batch=None, k_tap=None):
    """Forward pass: x (B, T, C_in) -> (B, T, C_out)."""
    assert x.shape[1] == params["T"] and x.shape[2] == params["C_in"]
    if params["mode"] == "toeplitz":
        return _apply_toeplitz(x, params, block_batch)
    return _apply_im2col(x, params, block_batch, k_tap)


def conv_embedding(x, weight, bias, pos_embedding, *, block_batch=None):
    """One-shot convenience API (re-packs every call -- prefer init + apply)."""
    params = conv_embedding_init(weight, bias, pos_embedding, x.shape[1])
    return conv_embedding_apply(x, params, block_batch=block_batch)


# ---------------------------------------------------------------------------
# Reference & test
# ---------------------------------------------------------------------------

def _reference(x, weight, bias, pos_embedding):
    # Pure-JAX reference matching PyTorch semantics (NCW conv, 'same' padding).
    B, T, C_in = x.shape
    C_out, _, K = weight.shape
    x_ncw = jnp.transpose(x, (0, 2, 1))                               # (B, C_in, T)
    y = lax.conv_general_dilated(
        x_ncw, weight, window_strides=(1,), padding=[(K // 2, K // 2)],
        dimension_numbers=("NCH", "OIH", "NCH"),
        precision=lax.Precision.HIGHEST)
    y = y + bias[None, :, None]
    y = jnp.transpose(y, (0, 2, 1))                                   # (B, T, C_out)
    return y + pos_embedding[:T][None]


if __name__ == "__main__":
    # Small shapes consistent with the module's forward:
    # x: (batch, time_steps, feature_dim) = (2, 16, 8); out_channels = 32.
    B, T, C_in, C_out = 2, 16, 8, 32
    maxlen, K = 64, 11

    key = jax.random.PRNGKey(0)
    kx, kw, kb, kp = jax.random.split(key, 4)
    x = jax.random.normal(kx, (B, T, C_in), dtype=jnp.float32)
    weight = jax.random.normal(kw, (C_out, C_in, K), dtype=jnp.float32) * 0.1
    bias = jax.random.normal(kb, (C_out,), dtype=jnp.float32) * 0.1
    pos_embedding = jax.random.normal(kp, (maxlen, C_out), dtype=jnp.float32) * 0.02

    ref = jax.block_until_ready(_reference(x, weight, bias, pos_embedding))

    # Primary path at these shapes: banded/Toeplitz weight, lane-dense output.
    params = conv_embedding_init(weight, bias, pos_embedding, T)
    out = jax.block_until_ready(conv_embedding_apply(x, params))
    np.testing.assert_allclose(np.asarray(out), np.asarray(ref), rtol=1e-5, atol=1e-5)

    # Exercise the large-T fallback kernel too (both variants), so it stays healthy.
    params_f = conv_embedding_init(weight, bias, pos_embedding, T, mode="im2col")
    out_f = jax.block_until_ready(conv_embedding_apply(x, params_f))
    np.testing.assert_allclose(np.asarray(out_f), np.asarray(ref), rtol=1e-5, atol=1e-5)

    out_k = jax.block_until_ready(conv_embedding_apply(x, params_f, k_tap=True))
    np.testing.assert_allclose(np.asarray(out_k), np.asarray(ref), rtol=1e-5, atol=1e-5)

    print("KERNEL_OK")
</pallas_src>

<mosaic_0001>
module attributes {stable_mosaic.version = 11 : i64} {
  func.func @_toeplitz_kernel(%arg0: i32, %arg1: memref<2x128xf32, #tpu.memory_space<vmem>>, %arg2: memref<128x512xf32, #tpu.memory_space<vmem>>, %arg3: memref<1x512xf32, #tpu.memory_space<vmem>>, %arg4: memref<2x512xf32, #tpu.memory_space<vmem>>) attributes {dimension_semantics = [#tpu.dimension_semantics<parallel>], iteration_bounds = array<i64: 1>, scalar_prefetch = 0 : i64, scratch_operands = 0 : i64, tpu.core_type = #tpu.core_type<tc>, window_params = [{transform_indices = @transform_0, window_bounds = array<i64: 2, 128>}, {pipeline_mode = #tpu.pipeline_mode<synchronous>, transform_indices = @transform_1, window_bounds = array<i64: 128, 512>}, {pipeline_mode = #tpu.pipeline_mode<synchronous>, transform_indices = @transform_2, window_bounds = array<i64: 1, 512>}, {transform_indices = @transform_3, window_bounds = array<i64: 2, 512>}]} {
    %c0 = arith.constant 0 : index
    %c0_0 = arith.constant 0 : index
    %0 = vector.load %arg1[%c0, %c0_0] : memref<2x128xf32, #tpu.memory_space<vmem>>, vector<2x128xf32>
    %c0_1 = arith.constant 0 : index
    %c0_2 = arith.constant 0 : index
    %1 = vector.load %arg2[%c0_1, %c0_2] : memref<128x512xf32, #tpu.memory_space<vmem>>, vector<128x512xf32>
    %cst = arith.constant dense<0.000000e+00> : vector<2x512xf32>
    %2 = tpu.matmul %0, %1, %cst {dimension_numbers = #tpu.dot_dimension_numbers<[1], [0], [0], [1], [0, 0, 1, 1], [], []>, precision = #tpu.contract_precision<fp32>} : vector<2x128xf32>, vector<128x512xf32>, vector<2x512xf32> -> vector<2x512xf32>
    %c0_3 = arith.constant 0 : index
    %c0_4 = arith.constant 0 : index
    %3 = vector.load %arg3[%c0_3, %c0_4] : memref<1x512xf32, #tpu.memory_space<vmem>>, vector<1x512xf32>
    %4 = vector.broadcast %3 : vector<1x512xf32> to vector<2x512xf32>
    %5 = arith.addf %2, %4 : vector<2x512xf32>
    %c0_5 = arith.constant 0 : index
    %c0_6 = arith.constant 0 : index
    %6 = vector.load %arg4[%c0_5, %c0_6] : memref<2x512xf32, #tpu.memory_space<vmem>>, vector<2x512xf32>
    tpu.vector_store %arg4[%c0_5, %c0_6], %5 {strides = array<i32>} : memref<2x512xf32, #tpu.memory_space<vmem>>, vector<2x512xf32>,
    return
  }
  func.func @transform_0(%arg0: i32) -> (i32, i32) {
    %c0_i32 = arith.constant 0 : i32
    %c0_i32_0 = arith.constant 0 : i32
    return %arg0, %c0_i32 : i32, i32
  }
  func.func @transform_1(%arg0: i32) -> (i32, i32) {
    %c0_i32 = arith.constant 0 : i32
    %c0_i32_0 = arith.constant 0 : i32
    %c0_i32_1 = arith.constant 0 : i32
    return %c0_i32, %c0_i32_0 : i32, i32
  }
  func.func @transform_2(%arg0: i32) -> (i32, i32) {
    %c0_i32 = arith.constant 0 : i32
    %c0_i32_0 = arith.constant 0 : i32
    %c0_i32_1 = arith.constant 0 : i32
    return %c0_i32, %c0_i32_0 : i32, i32
  }
  func.func @transform_3(%arg0: i32) -> (i32, i32) {
    %c0_i32 = arith.constant 0 : i32
    %c0_i32_0 = arith.constant 0 : i32
    return %arg0, %c0_i32 : i32, i32
  }
}

</mosaic_0001>

<llo_original>
// kernel: tpu_custom_call.1
$region0: #{tpu_custom_call.1}
  #allocation0 [shape = 'u32[]', space=smem, size = 0x4, offset = 0x4, fixed_abs, tag = 'smem constant byte address 0x4 - core index']
  #allocation1 [shape = 'u32[144,128]{1,0:T(1,128)}', space=vmem, size = 0x12000, scoped, tag = 'internal scratch']
  %s0 = inlined_call_operand.hbm [shape: f32[2,128], index: 0, kind: input, shape index: {}]
  %s1 = inlined_call_operand.hbm [shape: f32[128,512], index: 1, kind: input, shape index: {}]
  %s2 = inlined_call_operand.vmem [shape: f32[1,512], index: 2, kind: input, shape index: {}]
  %s3 = inlined_call_operand.hbm [shape: f32[2,512], index: 3, kind: output, shape index: {}]
  %s4 = sld [smem:[#allocation0]]
  $region30: #{tpu_custom_call.1} parent=0
    _
  %s6 = ssub.s32 1, %s4
  %s7 = scalar_select 0, %s6, %s4
  $region1: #{tpu_custom_call.1} parent=0
    #allocation2 [shape = 'u8[1024]{0}', space=vmem, size = 0x400, scoped, tag = 'input window, operand 0, single buffered']
    #allocation3 [shape = 's32[1]{0}', space=sflag, size = 0x4, scoped, tag = 'scoped memory for tpu_custom_call.1']
    #allocation4 [shape = 's32[1]{0}', space=sflag, size = 0x4, scoped, tag = 'scoped memory for tpu_custom_call.1']
    #allocation5 [shape = 'u8[262144]{0}', space=vmem, size = 0x40000, scoped, tag = 'input window, operand 1, single buffered']
    #allocation6 [shape = 's32[1]{0}', space=sflag, size = 0x4, scoped, tag = 'scoped memory for tpu_custom_call.1']
    #allocation7 [shape = 'u8[4096]{0}', space=vmem, size = 0x1000, scoped, tag = 'output window, operand 0, single buffered']
    %8 = vsyncpa [#allocation3], 0
    %9 = vsyncpa [#allocation6], 0
    %10 = vsyncpa [#allocation4], 0
    // Predicated region
    $region2: #{tpu_custom_call.1} parent=1 // pred_check
      _
    $region3: #{tpu_custom_call.1} parent=1 // pred_check_branch
      %12 = sbr.rel (0) target = $region5
    $region4: #{tpu_custom_call.1} parent=1 // pred_region
      %s14 = ssub.s32 32, 32
      %15 = vsyncadd [#allocation3], %s14
      %s17 = sshll.u32 [#allocation2], 4
      %s18 = int_to_ptr.vmem [resolvable:$true] %s17
      %20 = dma.hbm_to_vmem [thread:$0]  %s0, 32, %s18, [#allocation3]
    $region5: #{tpu_custom_call.1} parent=1 // pred_fallthru
      _
    // Predicated region
    $region6: #{tpu_custom_call.1} parent=1 // pred_check
      _
    $region7: #{tpu_custom_call.1} parent=1 // pred_check_branch
      %22 = sbr.rel (0) target = $region9
    $region8: #{tpu_custom_call.1} parent=1 // pred_region
      %s24 = ssub.s32 8192, 8192
      %25 = vsyncadd [#allocation6], %s24
      %s26 = sshll.u32 [#allocation5], 4
      %s27 = int_to_ptr.vmem [resolvable:$true] %s26
      %32 = dma.hbm_to_vmem [thread:$0]  %s1, 8192, %s27, [#allocation6], 512, 512, 32
    $region9: #{tpu_custom_call.1} parent=1 // pred_fallthru
      _
    // Predicated region
    $region10: #{tpu_custom_call.1} parent=1 // pred_check
      _
    $region11: #{tpu_custom_call.1} parent=1 // pred_check_branch
      %34 = sbr.rel (0) target = $region13
    $region12: #{tpu_custom_call.1} parent=1 // pred_region
      _
    $region13: #{tpu_custom_call.1} parent=1 // pred_fallthru
      _
    // Predicated region
    $region14: #{tpu_custom_call.1} parent=1 // pred_check
      _
    $region15: #{tpu_custom_call.1} parent=1 // pred_check_branch
      %36 = sbr.rel (0) target = $region17
    $region16: #{tpu_custom_call.1} parent=1 // pred_region
      %37 = dma.done [#allocation3], 32
    $region17: #{tpu_custom_call.1} parent=1 // pred_fallthru
      _
    // Predicated region
    $region18: #{tpu_custom_call.1} parent=1 // pred_check
      _
    $region19: #{tpu_custom_call.1} parent=1 // pred_check_branch
      %39 = sbr.rel (0) target = $region21
    $region20: #{tpu_custom_call.1} parent=1 // pred_region
      %40 = dma.done [#allocation6], 8192
    $region21: #{tpu_custom_call.1} parent=1 // pred_fallthru
      _
    %v41 = vld [vmem:[#allocation2] sm:$0x3]
    %v42 = vld [vmem:[#allocation5] sm:$0xff]
    %v43 = vld [vmem:[#allocation5 + $0x8] sm:$0xff]
    %v44 = vld [vmem:[#allocation5 + $0x10] sm:$0xff]
    %v45 = vld [vmem:[#allocation5 + $0x18] sm:$0xff]
    %v46 = vld [vmem:[#allocation5 + $0x20] sm:$0xff]
    %v47 = vld [vmem:[#allocation5 + $0x28] sm:$0xff]
    %v48 = vld [vmem:[#allocation5 + $0x30] sm:$0xff]
    %v49 = vld [vmem:[#allocation5 + $0x38] sm:$0xff]
    %v50 = vld [vmem:[#allocation5 + $0x40] sm:$0xff]
    %v51 = vld [vmem:[#allocation5 + $0x48] sm:$0xff]
    %v52 = vld [vmem:[#allocation5 + $0x50] sm:$0xff]
    %v53 = vld [vmem:[#allocation5 + $0x58] sm:$0xff]
    %v54 = vld [vmem:[#allocation5 + $0x60] sm:$0xff]
    %v55 = vld [vmem:[#allocation5 + $0x68] sm:$0xff]
    %v56 = vld [vmem:[#allocation5 + $0x70] sm:$0xff]
    %v57 = vld [vmem:[#allocation5 + $0x78] sm:$0xff]
    %v58 = vld [vmem:[#allocation5 + $0x80] sm:$0xff]
    %v59 = vld [vmem:[#allocation5 + $0x88] sm:$0xff]
    %v60 = vld [vmem:[#allocation5 + $0x90] sm:$0xff]
    %v61 = vld [vmem:[#allocation5 + $0x98] sm:$0xff]
    %v62 = vld [vmem:[#allocation5 + $0xa0] sm:$0xff]
    %v63 = vld [vmem:[#allocation5 + $0xa8] sm:$0xff]
    %v64 = vld [vmem:[#allocation5 + $0xb0] sm:$0xff]
    %v65 = vld [vmem:[#allocation5 + $0xb8] sm:$0xff]
    %v66 = vld [vmem:[#allocation5 + $0xc0] sm:$0xff]
    %v67 = vld [vmem:[#allocation5 + $0xc8] sm:$0xff]
    %v68 = vld [vmem:[#allocation5 + $0xd0] sm:$0xff]
    %v69 = vld [vmem:[#allocation5 + $0xd8] sm:$0xff]
    %v70 = vld [vmem:[#allocation5 + $0xe0] sm:$0xff]
    %v71 = vld [vmem:[#allocation5 + $0xe8] sm:$0xff]
    %v72 = vld [vmem:[#allocation5 + $0xf0] sm:$0xff]
    %v73 = vld [vmem:[#allocation5 + $0xf8] sm:$0xff]
    %v74 = vld [vmem:[#allocation5 + $0x100] sm:$0xff]
    %v75 = vld [vmem:[#allocation5 + $0x108] sm:$0xff]
    %v76 = vld [vmem:[#allocation5 + $0x110] sm:$0xff]
    %v77 = vld [vmem:[#allocation5 + $0x118] sm:$0xff]
    %v78 = vld [vmem:[#allocation5 + $0x120] sm:$0xff]
    %v79 = vld [vmem:[#allocation5 + $0x128] sm:$0xff]
    %v80 = vld [vmem:[#allocation5 + $0x130] sm:$0xff]
    %v81 = vld [vmem:[#allocation5 + $0x138] sm:$0xff]
    %v82 = vld [vmem:[#allocation5 + $0x140] sm:$0xff]
    %v83 = vld [vmem:[#allocation5 + $0x148] sm:$0xff]
    %v84 = vld [vmem:[#allocation5 + $0x150] sm:$0xff]
    %v85 = vld [vmem:[#allocation5 + $0x158] sm:$0xff]
    %v86 = vld [vmem:[#allocation5 + $0x160] sm:$0xff]
    %v87 = vld [vmem:[#allocation5 + $0x168] sm:$0xff]
    %v88 = vld [vmem:[#allocation5 + $0x170] sm:$0xff]
    %v89 = vld [vmem:[#allocation5 + $0x178] sm:$0xff]
    %v90 = vld [vmem:[#allocation5 + $0x180] sm:$0xff]
    %v91 = vld [vmem:[#allocation5 + $0x188] sm:$0xff]
    %v92 = vld [vmem:[#allocation5 + $0x190] sm:$0xff]
    %v93 = vld [vmem:[#allocation5 + $0x198] sm:$0xff]
    %v94 = vld [vmem:[#allocation5 + $0x1a0] sm:$0xff]
    %v95 = vld [vmem:[#allocation5 + $0x1a8] sm:$0xff]
    %v96 = vld [vmem:[#allocation5 + $0x1b0] sm:$0xff]
    %v97 = vld [vmem:[#allocation5 + $0x1b8] sm:$0xff]
    %v98 = vld [vmem:[#allocation5 + $0x1c0] sm:$0xff]
    %v99 = vld [vmem:[#allocation5 + $0x1c8] sm:$0xff]
    %v100 = vld [vmem:[#allocation5 + $0x1d0] sm:$0xff]
    %v101 = vld [vmem:[#allocation5 + $0x1d8] sm:$0xff]
    %v102 = vld [vmem:[#allocation5 + $0x1e0] sm:$0xff]
    %v103 = vld [vmem:[#allocation5 + $0x1e8] sm:$0xff]
    %v104 = vld [vmem:[#allocation5 + $0x1f0] sm:$0xff]
    %v105 = vld [vmem:[#allocation5 + $0x1f8] sm:$0xff]
    %v106 = vld [vmem:[%s2] sm:$0xf]
    %v108 = vlaneseq
    %v109 = vshrl.u32 %v108, 7
    %v110 = vsub.s32 0, %v109
    %v111 = vrot.slane %v106, %v110
    %v112 = vlaneseq
    %v113 = vshrl.u32 %v112, 7
    %v114 = vsub.s32 1, %v113
    %v115 = vrot.slane %v106, %v114
    %v116 = vlaneseq
    %v117 = vshrl.u32 %v116, 7
    %v118 = vsub.s32 2, %v117
    %v119 = vrot.slane %v106, %v118
    %v120 = vlaneseq
    %v121 = vshrl.u32 %v120, 7
    %v122 = vsub.s32 3, %v121
    %v123 = vrot.slane %v106, %v122
    %v128 = vand.u32 %v43, 4294901760
    %129 = vmatprep.subr.mxu0 %v128
    %v130 = vand.u32 %v42, 4294901760
    %131 = vmatpush1.msra.mxu0 %v130
    %v132 = vand.u32 %v47, 4294901760
    %133 = vmatprep.subr.mxu0 %v132
    %v134 = vand.u32 %v46, 4294901760
    %135 = vmatpush1.msra.mxu0 %v134
    %v136 = vand.u32 %v51, 4294901760
    %137 = vmatprep.subr.mxu0 %v136
    %v138 = vand.u32 %v50, 4294901760
    %139 = vmatpush1.msra.mxu0 %v138
    %v140 = vand.u32 %v55, 4294901760
    %141 = vmatprep.subr.mxu0 %v140
    %v142 = vand.u32 %v54, 4294901760
    %143 = vmatpush1.msra.mxu0 %v142
    %v144 = vand.u32 %v59, 4294901760
    %145 = vmatprep.subr.mxu0 %v144
    %v146 = vand.u32 %v58, 4294901760
    %147 = vmatpush1.msra.mxu0 %v146
    %v148 = vand.u32 %v63, 4294901760
    %149 = vmatprep.subr.mxu0 %v148
    %v150 = vand.u32 %v62, 4294901760
    %151 = vmatpush1.msra.mxu0 %v150
    %v152 = vand.u32 %v67, 4294901760
    %153 = vmatprep.subr.mxu0 %v152
    %v154 = vand.u32 %v66, 4294901760
    %155 = vmatpush1.msra.mxu0 %v154
    %v156 = vand.u32 %v71, 4294901760
    %157 = vmatprep.subr.mxu0 %v156
    %v158 = vand.u32 %v70, 4294901760
    %159 = vmatpush1.msra.mxu0 %v158
    %v160 = vand.u32 %v75, 4294901760
    %161 = vmatprep.subr.mxu0 %v160
    %v162 = vand.u32 %v74, 4294901760
    %163 = vmatpush1.msra.mxu0 %v162
    %v164 = vand.u32 %v79, 4294901760
    %165 = vmatprep.subr.mxu0 %v164
    %v166 = vand.u32 %v78, 4294901760
    %167 = vmatpush1.msra.mxu0 %v166
    %v168 = vand.u32 %v83, 4294901760
    %169 = vmatprep.subr.mxu0 %v168
    %v170 = vand.u32 %v82, 4294901760
    %171 = vmatpush1.msra.mxu0 %v170
    %v172 = vand.u32 %v87, 4294901760
    %173 = vmatprep.subr.mxu0 %v172
    %v174 = vand.u32 %v86, 4294901760
    %175 = vmatpush1.msra.mxu0 %v174
    %v176 = vand.u32 %v91, 4294901760
    %177 = vmatprep.subr.mxu0 %v176
    %v178 = vand.u32 %v90, 4294901760
    %179 = vmatpush1.msra.mxu0 %v178
    %v180 = vand.u32 %v95, 4294901760
    %181 = vmatprep.subr.mxu0 %v180
    %v182 = vand.u32 %v94, 4294901760
    %183 = vmatpush1.msra.mxu0 %v182
    %v184 = vand.u32 %v99, 4294901760
    %185 = vmatprep.subr.mxu0 %v184
    %v186 = vand.u32 %v98, 4294901760
    %187 = vmatpush1.msra.mxu0 %v186
    %v188 = vand.u32 %v103, 4294901760
    %189 = vmatprep.subr.mxu0 %v188
    %v190 = vand.u32 %v102, 4294901760
    %191 = vmatpush1.msra.mxu0 %v190
    %192 = vmatprep.subr.mxu0 0.0
    %193 = vmatpush1.msra.mxu0 0.0
    %194 = vmatprep.subr.mxu0 0.0
    %195 = vmatpush1.msra.mxu0 0.0
    %196 = vmatprep.subr.mxu0 0.0
    %197 = vmatpush1.msra.mxu0 0.0
    %198 = vmatprep.subr.mxu0 0.0
    %199 = vmatpush1.msra.mxu0 0.0
    %200 = vmatprep.subr.mxu0 0.0
    %201 = vmatpush1.msra.mxu0 0.0
    %202 = vmatprep.subr.mxu0 0.0
    %203 = vmatpush1.msra.mxu0 0.0
    %204 = vmatprep.subr.mxu0 0.0
    %205 = vmatpush1.msra.mxu0 0.0
    %206 = vmatprep.subr.mxu0 0.0
    %207 = vmatpush1.msra.mxu0 0.0
    %208 = vmatprep.subr.mxu0 0.0
    %209 = vmatpush1.msra.mxu0 0.0
    %210 = vmatprep.subr.mxu0 0.0
    %211 = vmatpush1.msra.mxu0 0.0
    %212 = vmatprep.subr.mxu0 0.0
    %213 = vmatpush1.msra.mxu0 0.0
    %214 = vmatprep.subr.mxu0 0.0
    %215 = vmatpush1.msra.mxu0 0.0
    %216 = vmatprep.subr.mxu0 0.0
    %217 = vmatpush1.msra.mxu0 0.0
    %218 = vmatprep.subr.mxu0 0.0
    %219 = vmatpush1.msra.mxu0 0.0
    %220 = vmatprep.subr.mxu0 0.0
    %221 = vmatpush1.msra.mxu0 0.0
    %222 = vmatprep.subr.mxu0 0.0
    %223 = vmatpush1.msra.mxu0 0.0
    %224 = vmatprep.mubr.f32.mxu0 0.0
    %v225 = vand.u32 %v41, 4294901760
    %v226 = vsub.f32 %v41, %v225
    %v227 = vand.u32 %v226, 4294901760
    %v228 = vsub.f32 %v226, %v227
    %v229 = vand.u32 %v228, 4294901760
    %230 = vmatmul.mubr.f32.gmra.mrb[0].mxu0 %v229
    %v231 = vpop.f32.mrb[0].mxu0
    %v232 = vadd.f32 %v111, %v231
    %v233 = vpop.f32.mrb[0].mxu0
    %v234 = vadd.f32 %v115, %v233
    %235 = vdwg.mxu0
    %v236 = vand.u32 %v43, 4294901760
    %v237 = vsub.f32 %v43, %v236
    %v238 = vand.u32 %v237, 4294901760
    %v239 = vsub.f32 %v237, %v238
    %v240 = vand.u32 %v239, 4294901760
    %241 = vmatprep.subr.mxu0 %v240
    %v242 = vand.u32 %v42, 4294901760
    %v243 = vsub.f32 %v42, %v242
    %v244 = vand.u32 %v243, 4294901760
    %v245 = vsub.f32 %v243, %v244
    %v246 = vand.u32 %v245, 4294901760
    %247 = vmatpush1.msra.mxu0 %v246
    %v248 = vand.u32 %v47, 4294901760
    %v249 = vsub.f32 %v47, %v248
    %v250 = vand.u32 %v249, 4294901760
    %v251 = vsub.f32 %v249, %v250
    %v252 = vand.u32 %v251, 4294901760
    %253 = vmatprep.subr.mxu0 %v252
    %v254 = vand.u32 %v46, 4294901760
    %v255 = vsub.f32 %v46, %v254
    %v256 = vand.u32 %v255, 4294901760
    %v257 = vsub.f32 %v255, %v256
    %v258 = vand.u32 %v257, 4294901760
    %259 = vmatpush1.msra.mxu0 %v258
    %v260 = vand.u32 %v51, 4294901760
    %v261 = vsub.f32 %v51, %v260
    %v262 = vand.u32 %v261, 4294901760
    %v263 = vsub.f32 %v261, %v262
    %v264 = vand.u32 %v263, 4294901760
    %265 = vmatprep.subr.mxu0 %v264
    %v266 = vand.u32 %v50, 4294901760
    %v267 = vsub.f32 %v50, %v266
    %v268 = vand.u32 %v267, 4294901760
    %v269 = vsub.f32 %v267, %v268
    %v270 = vand.u32 %v269, 4294901760
    %271 = vmatpush1.msra.mxu0 %v270
    %v272 = vand.u32 %v55, 4294901760
    %v273 = vsub.f32 %v55, %v272
    %v274 = vand.u32 %v273, 4294901760
    %v275 = vsub.f32 %v273, %v274
    %v276 = vand.u32 %v275, 4294901760
    %277 = vmatprep.subr.mxu0 %v276
    %v278 = vand.u32 %v54, 4294901760
    %v279 = vsub.f32 %v54, %v278
    %v280 = vand.u32 %v279, 4294901760
    %v281 = vsub.f32 %v279, %v280
    %v282 = vand.u32 %v281, 4294901760
    %283 = vmatpush1.msra.mxu0 %v282
    %v284 = vand.u32 %v59, 4294901760
    %v285 = vsub.f32 %v59, %v284
    %v286 = vand.u32 %v285, 4294901760
    %v287 = vsub.f32 %v285, %v286
    %v288 = vand.u32 %v287, 4294901760
    %289 = vmatprep.subr.mxu0 %v288
    %v290 = vand.u32 %v58, 4294901760
    %v291 = vsub.f32 %v58, %v290
    %v292 = vand.u32 %v291, 4294901760
    %v293 = vsub.f32 %v291, %v292
    %v294 = vand.u32 %v293, 4294901760
    %295 = vmatpush1.msra.mxu0 %v294
    %v296 = vand.u32 %v63, 4294901760
    %v297 = vsub.f32 %v63, %v296
    %v298 = vand.u32 %v297, 4294901760
    %v299 = vsub.f32 %v297, %v298
    %v300 = vand.u32 %v299, 4294901760
    %301 = vmatprep.subr.mxu0 %v300
    %v302 = vand.u32 %v62, 4294901760
    %v303 = vsub.f32 %v62, %v302
    %v304 = vand.u32 %v303, 4294901760
    %v305 = vsub.f32 %v303, %v304
    %v306 = vand.u32 %v305, 4294901760
    %307 = vmatpush1.msra.mxu0 %v306
    %v308 = vand.u32 %v67, 4294901760
    %v309 = vsub.f32 %v67, %v308
    %v310 = vand.u32 %v309, 4294901760
    %v311 = vsub.f32 %v309, %v310
    %v312 = vand.u32 %v311, 4294901760
    %313 = vmatprep.subr.mxu0 %v312
    %v314 = vand.u32 %v66, 4294901760
    %v315 = vsub.f32 %v66, %v314
    %v316 = vand.u32 %v315, 4294901760
    %v317 = vsub.f32 %v315, %v316
    %v318 = vand.u32 %v317, 4294901760
    %319 = vmatpush1.msra.mxu0 %v318
    %v320 = vand.u32 %v71, 4294901760
    %v321 = vsub.f32 %v71, %v320
    %v322 = vand.u32 %v321, 4294901760
    %v323 = vsub.f32 %v321, %v322
    %v324 = vand.u32 %v323, 4294901760
    %325 = vmatprep.subr.mxu0 %v324
    %v326 = vand.u32 %v70, 4294901760
    %v327 = vsub.f32 %v70, %v326
    %v328 = vand.u32 %v327, 4294901760
    %v329 = vsub.f32 %v327, %v328
    %v330 = vand.u32 %v329, 4294901760
    %331 = vmatpush1.msra.mxu0 %v330
    %v332 = vand.u32 %v75, 4294901760
    %v333 = vsub.f32 %v75, %v332
    %v334 = vand.u32 %v333, 4294901760
    %v335 = vsub.f32 %v333, %v334
    %v336 = vand.u32 %v335, 4294901760
    %337 = vmatprep.subr.mxu0 %v336
    %v338 = vand.u32 %v74, 4294901760
    %v339 = vsub.f32 %v74, %v338
    %v340 = vand.u32 %v339, 4294901760
    %v341 = vsub.f32 %v339, %v340
    %v342 = vand.u32 %v341, 4294901760
    %343 = vmatpush1.msra.mxu0 %v342
    %v344 = vand.u32 %v79, 4294901760
    %v345 = vsub.f32 %v79, %v344
    %v346 = vand.u32 %v345, 4294901760
    %v347 = vsub.f32 %v345, %v346
    %v348 = vand.u32 %v347, 4294901760
    %349 = vmatprep.subr.mxu0 %v348
    %v350 = vand.u32 %v78, 4294901760
    %v351 = vsub.f32 %v78, %v350
    %v352 = vand.u32 %v351, 4294901760
    %v353 = vsub.f32 %v351, %v352
    %v354 = vand.u32 %v353, 4294901760
    %355 = vmatpush1.msra.mxu0 %v354
    %v356 = vand.u32 %v83, 4294901760
    %v357 = vsub.f32 %v83, %v356
    %v358 = vand.u32 %v357, 4294901760
    %v359 = vsub.f32 %v357, %v358
    %v360 = vand.u32 %v359, 4294901760
    %361 = vmatprep.subr.mxu0 %v360
    %v362 = vand.u32 %v82, 4294901760
    %v363 = vsub.f32 %v82, %v362
    %v364 = vand.u32 %v363, 4294901760
    %v365 = vsub.f32 %v363, %v364
    %v366 = vand.u32 %v365, 4294901760
    %367 = vmatpush1.msra.mxu0 %v366
    %v368 = vand.u32 %v87, 4294901760
    %v369 = vsub.f32 %v87, %v368
    %v370 = vand.u32 %v369, 4294901760
    %v371 = vsub.f32 %v369, %v370
    %v372 = vand.u32 %v371, 4294901760
    %373 = vmatprep.subr.mxu0 %v372
    %v374 = vand.u32 %v86, 4294901760
    %v375 = vsub.f32 %v86, %v374
    %v376 = vand.u32 %v375, 4294901760
    %v377 = vsub.f32 %v375, %v376
    %v378 = vand.u32 %v377, 4294901760
    %379 = vmatpush1.msra.mxu0 %v378
    %v380 = vand.u32 %v91, 4294901760
    %v381 = vsub.f32 %v91, %v380
    %v382 = vand.u32 %v381, 4294901760
    %v383 = vsub.f32 %v381, %v382
    %v384 = vand.u32 %v383, 4294901760
    %385 = vmatprep.subr.mxu0 %v384
    %v386 = vand.u32 %v90, 4294901760
    %v387 = vsub.f32 %v90, %v386
    %v388 = vand.u32 %v387, 4294901760
    %v389 = vsub.f32 %v387, %v388
    %v390 = vand.u32 %v389, 4294901760
    %391 = vmatpush1.msra.mxu0 %v390
    %v392 = vand.u32 %v95, 4294901760
    %v393 = vsub.f32 %v95, %v392
    %v394 = vand.u32 %v393, 4294901760
    %v395 = vsub.f32 %v393, %v394
    %v396 = vand.u32 %v395, 4294901760
    %397 = vmatprep.subr.mxu0 %v396
    %v398 = vand.u32 %v94, 4294901760
    %v399 = vsub.f32 %v94, %v398
    %v400 = vand.u32 %v399, 4294901760
    %v401 = vsub.f32 %v399, %v400
    %v402 = vand.u32 %v401, 4294901760
    %403 = vmatpush1.msra.mxu0 %v402
    %v404 = vand.u32 %v99, 4294901760
    %v405 = vsub.f32 %v99, %v404
    %v406 = vand.u32 %v405, 4294901760
    %v407 = vsub.f32 %v405, %v406
    %v408 = vand.u32 %v407, 4294901760
    %409 = vmatprep.subr.mxu0 %v408
    %v410 = vand.u32 %v98, 4294901760
    %v411 = vsub.f32 %v98, %v410
    %v412 = vand.u32 %v411, 4294901760
    %v413 = vsub.f32 %v411, %v412
    %v414 = vand.u32 %v413, 4294901760
    %415 = vmatpush1.msra.mxu0 %v414
    %v416 = vand.u32 %v103, 4294901760
    %v417 = vsub.f32 %v103, %v416
    %v418 = vand.u32 %v417, 4294901760
    %v419 = vsub.f32 %v417, %v418
    %v420 = vand.u32 %v419, 4294901760
    %421 = vmatprep.subr.mxu0 %v420
    %v422 = vand.u32 %v102, 4294901760
    %v423 = vsub.f32 %v102, %v422
    %v424 = vand.u32 %v423, 4294901760
    %v425 = vsub.f32 %v423, %v424
    %v426 = vand.u32 %v425, 4294901760
    %427 = vmatpush1.msra.mxu0 %v426
    %428 = vmatprep.subr.mxu0 0.0
    %429 = vmatpush1.msra.mxu0 0.0
    %430 = vmatprep.subr.mxu0 0.0
    %431 = vmatpush1.msra.mxu0 0.0
    %432 = vmatprep.subr.mxu0 0.0
    %433 = vmatpush1.msra.mxu0 0.0
    %434 = vmatprep.subr.mxu0 0.0
    %435 = vmatpush1.msra.mxu0 0.0
    %436 = vmatprep.subr.mxu0 0.0
    %437 = vmatpush1.msra.mxu0 0.0
    %438 = vmatprep.subr.mxu0 0.0
    %439 = vmatpush1.msra.mxu0 0.0
    %440 = vmatprep.subr.mxu0 0.0
    %441 = vmatpush1.msra.mxu0 0.0
    %442 = vmatprep.subr.mxu0 0.0
    %443 = vmatpush1.msra.mxu0 0.0
    %444 = vmatprep.subr.mxu0 0.0
    %445 = vmatpush1.msra.mxu0 0.0
    %446 = vmatprep.subr.mxu0 0.0
    %447 = vmatpush1.msra.mxu0 0.0
    %448 = vmatprep.subr.mxu0 0.0
    %449 = vmatpush1.msra.mxu0 0.0
    %450 = vmatprep.subr.mxu0 0.0
    %451 = vmatpush1.msra.mxu0 0.0
    %452 = vmatprep.subr.mxu0 0.0
    %453 = vmatpush1.msra.mxu0 0.0
    %454 = vmatprep.subr.mxu0 0.0
    %455 = vmatpush1.msra.mxu0 0.0
    %456 = vmatprep.subr.mxu0 0.0
    %457 = vmatpush1.msra.mxu0 0.0
    %458 = vmatprep.subr.mxu0 0.0
    %459 = vmatpush1.msra.mxu0 0.0
    %460 = vmatprep.mubr.f32.mxu0 0.0
    %v461 = vand.u32 %v41, 4294901760
    %462 = vmatmul.mubr.f32.gmra.mrb[0].mxu0 %v461
    %v463 = vpop.f32.mrb[0].mxu0
    %v464 = vadd.f32 %v232, %v463
    %v465 = vpop.f32.mrb[0].mxu0
    %v466 = vadd.f32 %v234, %v465
    %467 = vdwg.mxu0
    %v468 = vand.u32 %v43, 4294901760
    %v469 = vsub.f32 %v43, %v468
    %470 = vmatprep.subr.mxu0 %v469
    %v471 = vand.u32 %v42, 4294901760
    %v472 = vsub.f32 %v42, %v471
    %473 = vmatpush1.msra.mxu0 %v472
    %v474 = vand.u32 %v47, 4294901760
    %v475 = vsub.f32 %v47, %v474
    %476 = vmatprep.subr.mxu0 %v475
    %v477 = vand.u32 %v46, 4294901760
    %v478 = vsub.f32 %v46, %v477
    %479 = vmatpush1.msra.mxu0 %v478
    %v480 = vand.u32 %v51, 4294901760
    %v481 = vsub.f32 %v51, %v480
    %482 = vmatprep.subr.mxu0 %v481
    %v483 = vand.u32 %v50, 4294901760
    %v484 = vsub.f32 %v50, %v483
    %485 = vmatpush1.msra.mxu0 %v484
    %v486 = vand.u32 %v55, 4294901760
    %v487 = vsub.f32 %v55, %v486
    %488 = vmatprep.subr.mxu0 %v487
    %v489 = vand.u32 %v54, 4294901760
    %v490 = vsub.f32 %v54, %v489
    %491 = vmatpush1.msra.mxu0 %v490
    %v492 = vand.u32 %v59, 4294901760
    %v493 = vsub.f32 %v59, %v492
    %494 = vmatprep.subr.mxu0 %v493
    %v495 = vand.u32 %v58, 4294901760
    %v496 = vsub.f32 %v58, %v495
    %497 = vmatpush1.msra.mxu0 %v496
    %v498 = vand.u32 %v63, 4294901760
    %v499 = vsub.f32 %v63, %v498
    %500 = vmatprep.subr.mxu0 %v499
    %v501 = vand.u32 %v62, 4294901760
    %v502 = vsub.f32 %v62, %v501
    %503 = vmatpush1.msra.mxu0 %v502
    %v504 = vand.u32 %v67, 4294901760
    %v505 = vsub.f32 %v67, %v504
    %506 = vmatprep.subr.mxu0 %v505
    %v507 = vand.u32 %v66, 4294901760
    %v508 = vsub.f32 %v66, %v507
    %509 = vmatpush1.msra.mxu0 %v508
    %v510 = vand.u32 %v71, 4294901760
    %v511 = vsub.f32 %v71, %v510
    %512 = vmatprep.subr.mxu0 %v511
    %v513 = vand.u32 %v70, 4294901760
    %v514 = vsub.f32 %v70, %v513
    %515 = vmatpush1.msra.mxu0 %v514
    %v516 = vand.u32 %v75, 4294901760
    %v517 = vsub.f32 %v75, %v516
    %518 = vmatprep.subr.mxu0 %v517
    %v519 = vand.u32 %v74, 4294901760
    %v520 = vsub.f32 %v74, %v519
    %521 = vmatpush1.msra.mxu0 %v520
    %v522 = vand.u32 %v79, 4294901760
    %v523 = vsub.f32 %v79, %v522
    %524 = vmatprep.subr.mxu0 %v523
    %v525 = vand.u32 %v78, 4294901760
    %v526 = vsub.f32 %v78, %v525
    %527 = vmatpush1.msra.mxu0 %v526
    %v528 = vand.u32 %v83, 4294901760
    %v529 = vsub.f32 %v83, %v528
    %530 = vmatprep.subr.mxu0 %v529
    %v531 = vand.u32 %v82, 4294901760
    %v532 = vsub.f32 %v82, %v531
    %533 = vmatpush1.msra.mxu0 %v532
    %v534 = vand.u32 %v87, 4294901760
    %v535 = vsub.f32 %v87, %v534
    %536 = vmatprep.subr.mxu0 %v535
    %v537 = vand.u32 %v86, 4294901760
    %v538 = vsub.f32 %v86, %v537
    %539 = vmatpush1.msra.mxu0 %v538
    %v540 = vand.u32 %v91, 4294901760
    %v541 = vsub.f32 %v91, %v540
    %542 = vmatprep.subr.mxu0 %v541
    %v543 = vand.u32 %v90, 4294901760
    %v544 = vsub.f32 %v90, %v543
    %545 = vmatpush1.msra.mxu0 %v544
    %v546 = vand.u32 %v95, 4294901760
    %v547 = vsub.f32 %v95, %v546
    %548 = vmatprep.subr.mxu0 %v547
    %v549 = vand.u32 %v94, 4294901760
    %v550 = vsub.f32 %v94, %v549
    %551 = vmatpush1.msra.mxu0 %v550
    %v552 = vand.u32 %v99, 4294901760
    %v553 = vsub.f32 %v99, %v552
    %554 = vmatprep.subr.mxu0 %v553
    %v555 = vand.u32 %v98, 4294901760
    %v556 = vsub.f32 %v98, %v555
    %557 = vmatpush1.msra.mxu0 %v556
    %v558 = vand.u32 %v103, 4294901760
    %v559 = vsub.f32 %v103, %v558
    %560 = vmatprep.subr.mxu0 %v559
    %v561 = vand.u32 %v102, 4294901760
    %v562 = vsub.f32 %v102, %v561
    %563 = vmatpush1.msra.mxu0 %v562
    %564 = vmatprep.subr.mxu0 0.0
    %565 = vmatpush1.msra.mxu0 0.0
    %566 = vmatprep.subr.mxu0 0.0
    %567 = vmatpush1.msra.mxu0 0.0
    %568 = vmatprep.subr.mxu0 0.0
    %569 = vmatpush1.msra.mxu0 0.0
    %570 = vmatprep.subr.mxu0 0.0
    %571 = vmatpush1.msra.mxu0 0.0
    %572 = vmatprep.subr.mxu0 0.0
    %573 = vmatpush1.msra.mxu0 0.0
    %574 = vmatprep.subr.mxu0 0.0
    %575 = vmatpush1.msra.mxu0 0.0
    %576 = vmatprep.subr.mxu0 0.0
    %577 = vmatpush1.msra.mxu0 0.0
    %578 = vmatprep.subr.mxu0 0.0
    %579 = vmatpush1.msra.mxu0 0.0
    %580 = vmatprep.subr.mxu0 0.0
    %581 = vmatpush1.msra.mxu0 0.0
    %582 = vmatprep.subr.mxu0 0.0
    %583 = vmatpush1.msra.mxu0 0.0
    %584 = vmatprep.subr.mxu0 0.0
    %585 = vmatpush1.msra.mxu0 0.0
    %586 = vmatprep.subr.mxu0 0.0
    %587 = vmatpush1.msra.mxu0 0.0
    %588 = vmatprep.subr.mxu0 0.0
    %589 = vmatpush1.msra.mxu0 0.0
    %590 = vmatprep.subr.mxu0 0.0
    %591 = vmatpush1.msra.mxu0 0.0
    %592 = vmatprep.subr.mxu0 0.0
    %593 = vmatpush1.msra.mxu0 0.0
    %594 = vmatprep.subr.mxu0 0.0
    %595 = vmatpush1.msra.mxu0 0.0
    %596 = vmatprep.mubr.f32.mxu0 0.0
    %v597 = vand.u32 %v41, 4294901760
    %v598 = vsub.f32 %v41, %v597
    %599 = vmatmul.mubr.f32.gmra.mrb[0].mxu0 %v598
    %v600 = vpop.f32.mrb[0].mxu0
    %v601 = vadd.f32 %v464, %v600
    %v602 = vpop.f32.mrb[0].mxu0
    %v603 = vadd.f32 %v466, %v602
    %604 = vdwg.mxu0
    %v605 = vand.u32 %v43, 4294901760
    %606 = vmatprep.subr.mxu0 %v605
    %v607 = vand.u32 %v42, 4294901760
    %608 = vmatpush1.msra.mxu0 %v607
    %v609 = vand.u32 %v47, 4294901760
    %610 = vmatprep.subr.mxu0 %v609
    %v611 = vand.u32 %v46, 4294901760
    %612 = vmatpush1.msra.mxu0 %v611
    %v613 = vand.u32 %v51, 4294901760
    %614 = vmatprep.subr.mxu0 %v613
    %v615 = vand.u32 %v50, 4294901760
    %616 = vmatpush1.msra.mxu0 %v615
    %v617 = vand.u32 %v55, 4294901760
    %618 = vmatprep.subr.mxu0 %v617
    %v619 = vand.u32 %v54, 4294901760
    %620 = vmatpush1.msra.mxu0 %v619
    %v621 = vand.u32 %v59, 4294901760
    %622 = vmatprep.subr.mxu0 %v621
    %v623 = vand.u32 %v58, 4294901760
    %624 = vmatpush1.msra.mxu0 %v623
    %v625 = vand.u32 %v63, 4294901760
    %626 = vmatprep.subr.mxu0 %v625
    %v627 = vand.u32 %v62, 4294901760
    %628 = vmatpush1.msra.mxu0 %v627
    %v629 = vand.u32 %v67, 4294901760
    %630 = vmatprep.subr.mxu0 %v629
    %v631 = vand.u32 %v66, 4294901760
    %632 = vmatpush1.msra.mxu0 %v631
    %v633 = vand.u32 %v71, 4294901760
    %634 = vmatprep.subr.mxu0 %v633
    %v635 = vand.u32 %v70, 4294901760
    %636 = vmatpush1.msra.mxu0 %v635
    %v637 = vand.u32 %v75, 4294901760
    %638 = vmatprep.subr.mxu0 %v637
    %v639 = vand.u32 %v74, 4294901760
    %640 = vmatpush1.msra.mxu0 %v639
    %v641 = vand.u32 %v79, 4294901760
    %642 = vmatprep.subr.mxu0 %v641
    %v643 = vand.u32 %v78, 4294901760
    %644 = vmatpush1.msra.mxu0 %v643
    %v645 = vand.u32 %v83, 4294901760
    %646 = vmatprep.subr.mxu0 %v645
    %v647 = vand.u32 %v82, 4294901760
    %648 = vmatpush1.msra.mxu0 %v647
    %v649 = vand.u32 %v87, 4294901760
    %650 = vmatprep.subr.mxu0 %v649
    %v651 = vand.u32 %v86, 4294901760
    %652 = vmatpush1.msra.mxu0 %v651
    %v653 = vand.u32 %v91, 4294901760
    %654 = vmatprep.subr.mxu0 %v653
    %v655 = vand.u32 %v90, 4294901760
    %656 = vmatpush1.msra.mxu0 %v655
    %v657 = vand.u32 %v95, 4294901760
    %658 = vmatprep.subr.mxu0 %v657
    %v659 = vand.u32 %v94, 4294901760
    %660 = vmatpush1.msra.mxu0 %v659
    %v661 = vand.u32 %v99, 4294901760
    %662 = vmatprep.subr.mxu0 %v661
    %v663 = vand.u32 %v98, 4294901760
    %664 = vmatpush1.msra.mxu0 %v663
    %v665 = vand.u32 %v103, 4294901760
    %666 = vmatprep.subr.mxu0 %v665
    %v667 = vand.u32 %v102, 4294901760
    %668 = vmatpush1.msra.mxu0 %v667
    %669 = vmatprep.subr.mxu0 0.0
    %670 = vmatpush1.msra.mxu0 0.0
    %671 = vmatprep.subr.mxu0 0.0
    %672 = vmatpush1.msra.mxu0 0.0
    %673 = vmatprep.subr.mxu0 0.0
    %674 = vmatpush1.msra.mxu0 0.0
    %675 = vmatprep.subr.mxu0 0.0
    %676 = vmatpush1.msra.mxu0 0.0
    %677 = vmatprep.subr.mxu0 0.0
    %678 = vmatpush1.msra.mxu0 0.0
    %679 = vmatprep.subr.mxu0 0.0
    %680 = vmatpush1.msra.mxu0 0.0
    %681 = vmatprep.subr.mxu0 0.0
    %682 = vmatpush1.msra.mxu0 0.0
    %683 = vmatprep.subr.mxu0 0.0
    %684 = vmatpush1.msra.mxu0 0.0
    %685 = vmatprep.subr.mxu0 0.0
    %686 = vmatpush1.msra.mxu0 0.0
    %687 = vmatprep.subr.mxu0 0.0
    %688 = vmatpush1.msra.mxu0 0.0
    %689 = vmatprep.subr.mxu0 0.0
    %690 = vmatpush1.msra.mxu0 0.0
    %691 = vmatprep.subr.mxu0 0.0
    %692 = vmatpush1.msra.mxu0 0.0
    %693 = vmatprep.subr.mxu0 0.0
    %694 = vmatpush1.msra.mxu0 0.0
    %695 = vmatprep.subr.mxu0 0.0
    %696 = vmatpush1.msra.mxu0 0.0
    %697 = vmatprep.subr.mxu0 0.0
    %698 = vmatpush1.msra.mxu0 0.0
    %699 = vmatprep.subr.mxu0 0.0
    %700 = vmatpush1.msra.mxu0 0.0
    %701 = vmatprep.mubr.f32.mxu0 0.0
    %v702 = vand.u32 %v41, 4294901760
    %v703 = vsub.f32 %v41, %v702
    %v704 = vand.u32 %v703, 4294901760
    %705 = vmatmul.mubr.f32.gmra.mrb[0].mxu0 %v704
    %v706 = vpop.f32.mrb[0].mxu0
    %v707 = vadd.f32 %v601, %v706
    %v708 = vpop.f32.mrb[0].mxu0
    %v709 = vadd.f32 %v603, %v708
    %710 = vdwg.mxu0
    %v711 = vand.u32 %v43, 4294901760
    %v712 = vsub.f32 %v43, %v711
    %v713 = vand.u32 %v712, 4294901760
    %714 = vmatprep.subr.mxu0 %v713
    %v715 = vand.u32 %v42, 4294901760
    %v716 = vsub.f32 %v42, %v715
    %v717 = vand.u32 %v716, 4294901760
    %718 = vmatpush1.msra.mxu0 %v717
    %v719 = vand.u32 %v47, 4294901760
    %v720 = vsub.f32 %v47, %v719
    %v721 = vand.u32 %v720, 4294901760
    %722 = vmatprep.subr.mxu0 %v721
    %v723 = vand.u32 %v46, 4294901760
    %v724 = vsub.f32 %v46, %v723
    %v725 = vand.u32 %v724, 4294901760
    %726 = vmatpush1.msra.mxu0 %v725
    %v727 = vand.u32 %v51, 4294901760
    %v728 = vsub.f32 %v51, %v727
    %v729 = vand.u32 %v728, 4294901760
    %730 = vmatprep.subr.mxu0 %v729
    %v731 = vand.u32 %v50, 4294901760
    %v732 = vsub.f32 %v50, %v731
    %v733 = vand.u32 %v732, 4294901760
    %734 = vmatpush1.msra.mxu0 %v733
    %v735 = vand.u32 %v55, 4294901760
    %v736 = vsub.f32 %v55, %v735
    %v737 = vand.u32 %v736, 4294901760
    %738 = vmatprep.subr.mxu0 %v737
    %v739 = vand.u32 %v54, 4294901760
    %v740 = vsub.f32 %v54, %v739
    %v741 = vand.u32 %v740, 4294901760
    %742 = vmatpush1.msra.mxu0 %v741
    %v743 = vand.u32 %v59, 4294901760
    %v744 = vsub.f32 %v59, %v743
    %v745 = vand.u32 %v744, 4294901760
    %746 = vmatprep.subr.mxu0 %v745
    %v747 = vand.u32 %v58, 4294901760
    %v748 = vsub.f32 %v58, %v747
    %v749 = vand.u32 %v748, 4294901760
    %750 = vmatpush1.msra.mxu0 %v749
    %v751 = vand.u32 %v63, 4294901760
    %v752 = vsub.f32 %v63, %v751
    %v753 = vand.u32 %v752, 4294901760
    %754 = vmatprep.subr.mxu0 %v753
    %v755 = vand.u32 %v62, 4294901760
    %v756 = vsub.f32 %v62, %v755
    %v757 = vand.u32 %v756, 4294901760
    %758 = vmatpush1.msra.mxu0 %v757
    %v759 = vand.u32 %v67, 4294901760
    %v760 = vsub.f32 %v67, %v759
    %v761 = vand.u32 %v760, 4294901760
    %762 = vmatprep.subr.mxu0 %v761
    %v763 = vand.u32 %v66, 4294901760
    %v764 = vsub.f32 %v66, %v763
    %v765 = vand.u32 %v764, 4294901760
    %766 = vmatpush1.msra.mxu0 %v765
    %v767 = vand.u32 %v71, 4294901760
    %v768 = vsub.f32 %v71, %v767
    %v769 = vand.u32 %v768, 4294901760
    %770 = vmatprep.subr.mxu0 %v769
    %v771 = vand.u32 %v70, 4294901760
    %v772 = vsub.f32 %v70, %v771
    %v773 = vand.u32 %v772, 4294901760
    %774 = vmatpush1.msra.mxu0 %v773
    %v775 = vand.u32 %v75, 4294901760
    %v776 = vsub.f32 %v75, %v775
    %v777 = vand.u32 %v776, 4294901760
    %778 = vmatprep.subr.mxu0 %v777
    %v779 = vand.u32 %v74, 4294901760
    %v780 = vsub.f32 %v74, %v779
    %v781 = vand.u32 %v780, 4294901760
    %782 = vmatpush1.msra.mxu0 %v781
    %v783 = vand.u32 %v79, 4294901760
    %v784 = vsub.f32 %v79, %v783
    %v785 = vand.u32 %v784, 4294901760
    %786 = vmatprep.subr.mxu0 %v785
    %v787 = vand.u32 %v78, 4294901760
    %v788 = vsub.f32 %v78, %v787
    %v789 = vand.u32 %v788, 4294901760
    %790 = vmatpush1.msra.mxu0 %v789
    %v791 = vand.u32 %v83, 4294901760
    %v792 = vsub.f32 %v83, %v791
    %v793 = vand.u32 %v792, 4294901760
    %794 = vmatprep.subr.mxu0 %v793
    %v795 = vand.u32 %v82, 4294901760
    %v796 = vsub.f32 %v82, %v795
    %v797 = vand.u32 %v796, 4294901760
    %798 = vmatpush1.msra.mxu0 %v797
    %v799 = vand.u32 %v87, 4294901760
    %v800 = vsub.f32 %v87, %v799
    %v801 = vand.u32 %v800, 4294901760
    %802 = vmatprep.subr.mxu0 %v801
    %v803 = vand.u32 %v86, 4294901760
    %v804 = vsub.f32 %v86, %v803
    %v805 = vand.u32 %v804, 4294901760
    %806 = vmatpush1.msra.mxu0 %v805
    %v807 = vand.u32 %v91, 4294901760
    %v808 = vsub.f32 %v91, %v807
    %v809 = vand.u32 %v808, 4294901760
    %810 = vmatprep.subr.mxu0 %v809
    %v811 = vand.u32 %v90, 4294901760
    %v812 = vsub.f32 %v90, %v811
    %v813 = vand.u32 %v812, 4294901760
    %814 = vmatpush1.msra.mxu0 %v813
    %v815 = vand.u32 %v95, 4294901760
    %v816 = vsub.f32 %v95, %v815
    %v817 = vand.u32 %v816, 4294901760
    %818 = vmatprep.subr.mxu0 %v817
    %v819 = vand.u32 %v94, 4294901760
    %v820 = vsub.f32 %v94, %v819
    %v821 = vand.u32 %v820, 4294901760
    %822 = vmatpush1.msra.mxu0 %v821
    %v823 = vand.u32 %v99, 4294901760
    %v824 = vsub.f32 %v99, %v823
    %v825 = vand.u32 %v824, 4294901760
    %826 = vmatprep.subr.mxu0 %v825
    %v827 = vand.u32 %v98, 4294901760
    %v828 = vsub.f32 %v98, %v827
    %v829 = vand.u32 %v828, 4294901760
    %830 = vmatpush1.msra.mxu0 %v829
    %v831 = vand.u32 %v103, 4294901760
    %v832 = vsub.f32 %v103, %v831
    %v833 = vand.u32 %v832, 4294901760
    %834 = vmatprep.subr.mxu0 %v833
    %v835 = vand.u32 %v102, 4294901760
    %v836 = vsub.f32 %v102, %v835
    %v837 = vand.u32 %v836, 4294901760
    %838 = vmatpush1.msra.mxu0 %v837
    %839 = vmatprep.subr.mxu0 0.0
    %840 = vmatpush1.msra.mxu0 0.0
    %841 = vmatprep.subr.mxu0 0.0
    %842 = vmatpush1.msra.mxu0 0.0
    %843 = vmatprep.subr.mxu0 0.0
    %844 = vmatpush1.msra.mxu0 0.0
    %845 = vmatprep.subr.mxu0 0.0
    %846 = vmatpush1.msra.mxu0 0.0
    %847 = vmatprep.subr.mxu0 0.0
    %848 = vmatpush1.msra.mxu0 0.0
    %849 = vmatprep.subr.mxu0 0.0
    %850 = vmatpush1.msra.mxu0 0.0
    %851 = vmatprep.subr.mxu0 0.0
    %852 = vmatpush1.msra.mxu0 0.0
    %853 = vmatprep.subr.mxu0 0.0
    %854 = vmatpush1.msra.mxu0 0.0
    %855 = vmatprep.subr.mxu0 0.0
    %856 = vmatpush1.msra.mxu0 0.0
    %857 = vmatprep.subr.mxu0 0.0
    %858 = vmatpush1.msra.mxu0 0.0
    %859 = vmatprep.subr.mxu0 0.0
    %860 = vmatpush1.msra.mxu0 0.0
    %861 = vmatprep.subr.mxu0 0.0
    %862 = vmatpush1.msra.mxu0 0.0
    %863 = vmatprep.subr.mxu0 0.0
    %864 = vmatpush1.msra.mxu0 0.0
    %865 = vmatprep.subr.mxu0 0.0
    %866 = vmatpush1.msra.mxu0 0.0
    %867 = vmatprep.subr.mxu0 0.0
    %868 = vmatpush1.msra.mxu0 0.0
    %869 = vmatprep.subr.mxu0 0.0
    %870 = vmatpush1.msra.mxu0 0.0
    %871 = vmatprep.mubr.f32.mxu0 0.0
    %v872 = vand.u32 %v41, 4294901760
    %873 = vmatmul.mubr.f32.gmra.mrb[0].mxu0 %v872
    %v874 = vpop.f32.mrb[0].mxu0
    %v875 = vadd.f32 %v707, %v874
    %v876 = vpop.f32.mrb[0].mxu0
    %v877 = vadd.f32 %v709, %v876
    %878 = vdwg.mxu0
    %v879 = vand.u32 %v43, 4294901760
    %880 = vmatprep.subr.mxu0 %v879
    %v881 = vand.u32 %v42, 4294901760
    %882 = vmatpush1.msra.mxu0 %v881
    %v883 = vand.u32 %v47, 4294901760
    %884 = vmatprep.subr.mxu0 %v883
    %v885 = vand.u32 %v46, 4294901760
    %886 = vmatpush1.msra.mxu0 %v885
    %v887 = vand.u32 %v51, 4294901760
    %888 = vmatprep.subr.mxu0 %v887
    %v889 = vand.u32 %v50, 4294901760
    %890 = vmatpush1.msra.mxu0 %v889
    %v891 = vand.u32 %v55, 4294901760
    %892 = vmatprep.subr.mxu0 %v891
    %v893 = vand.u32 %v54, 4294901760
    %894 = vmatpush1.msra.mxu0 %v893
    %v895 = vand.u32 %v59, 4294901760
    %896 = vmatprep.subr.mxu0 %v895
    %v897 = vand.u32 %v58, 4294901760
    %898 = vmatpush1.msra.mxu0 %v897
    %v899 = vand.u32 %v63, 4294901760
    %900 = vmatprep.subr.mxu0 %v899
    %v901 = vand.u32 %v62, 4294901760
    %902 = vmatpush1.msra.mxu0 %v901
    %v903 = vand.u32 %v67, 4294901760
    %904 = vmatprep.subr.mxu0 %v903
    %v905 = vand.u32 %v66, 4294901760
    %906 = vmatpush1.msra.mxu0 %v905
    %v907 = vand.u32 %v71, 4294901760
    %908 = vmatprep.subr.mxu0 %v907
    %v909 = vand.u32 %v70, 4294901760
    %910 = vmatpush1.msra.mxu0 %v909
    %v911 = vand.u32 %v75, 4294901760
    %912 = vmatprep.subr.mxu0 %v911
    %v913 = vand.u32 %v74, 4294901760
    %914 = vmatpush1.msra.mxu0 %v913
    %v915 = vand.u32 %v79, 4294901760
    %916 = vmatprep.subr.mxu0 %v915
    %v917 = vand.u32 %v78, 4294901760
    %918 = vmatpush1.msra.mxu0 %v917
    %v919 = vand.u32 %v83, 4294901760
    %920 = vmatprep.subr.mxu0 %v919
    %v921 = vand.u32 %v82, 4294901760
    %922 = vmatpush1.msra.mxu0 %v921
    %v923 = vand.u32 %v87, 4294901760
    %924 = vmatprep.subr.mxu0 %v923
    %v925 = vand.u32 %v86, 4294901760
    %926 = vmatpush1.msra.mxu0 %v925
    %v927 = vand.u32 %v91, 4294901760
    %928 = vmatprep.subr.mxu0 %v927
    %v929 = vand.u32 %v90, 4294901760
    %930 = vmatpush1.msra.mxu0 %v929
    %v931 = vand.u32 %v95, 4294901760
    %932 = vmatprep.subr.mxu0 %v931
    %v933 = vand.u32 %v94, 4294901760
    %934 = vmatpush1.msra.mxu0 %v933
    %v935 = vand.u32 %v99, 4294901760
    %936 = vmatprep.subr.mxu0 %v935
    %v937 = vand.u32 %v98, 4294901760
    %938 = vmatpush1.msra.mxu0 %v937
    %v939 = vand.u32 %v103, 4294901760
    %940 = vmatprep.subr.mxu0 %v939
    %v941 = vand.u32 %v102, 4294901760
    %942 = vmatpush1.msra.mxu0 %v941
    %943 = vmatprep.subr.mxu0 0.0
    %944 = vmatpush1.msra.mxu0 0.0
    %945 = vmatprep.subr.mxu0 0.0
    %946 = vmatpush1.msra.mxu0 0.0
    %947 = vmatprep.subr.mxu0 0.0
    %948 = vmatpush1.msra.mxu0 0.0
    %949 = vmatprep.subr.mxu0 0.0
    %950 = vmatpush1.msra.mxu0 0.0
    %951 = vmatprep.subr.mxu0 0.0
    %952 = vmatpush1.msra.mxu0 0.0
    %953 = vmatprep.subr.mxu0 0.0
    %954 = vmatpush1.msra.mxu0 0.0
    %955 = vmatprep.subr.mxu0 0.0
    %956 = vmatpush1.msra.mxu0 0.0
    %957 = vmatprep.subr.mxu0 0.0
    %958 = vmatpush1.msra.mxu0 0.0
    %959 = vmatprep.subr.mxu0 0.0
    %960 = vmatpush1.msra.mxu0 0.0
    %961 = vmatprep.subr.mxu0 0.0
    %962 = vmatpush1.msra.mxu0 0.0
    %963 = vmatprep.subr.mxu0 0.0
    %964 = vmatpush1.msra.mxu0 0.0
    %965 = vmatprep.subr.mxu0 0.0
    %966 = vmatpush1.msra.mxu0 0.0
    %967 = vmatprep.subr.mxu0 0.0
    %968 = vmatpush1.msra.mxu0 0.0
    %969 = vmatprep.subr.mxu0 0.0
    %970 = vmatpush1.msra.mxu0 0.0
    %971 = vmatprep.subr.mxu0 0.0
    %972 = vmatpush1.msra.mxu0 0.0
    %973 = vmatprep.subr.mxu0 0.0
    %974 = vmatpush1.msra.mxu0 0.0
    %975 = vmatprep.mubr.f32.mxu0 0.0
    %v976 = vand.u32 %v41, 4294901760
    %977 = vmatmul.mubr.f32.gmra.mrb[0].mxu0 %v976
    %v978 = vpop.f32.mrb[0].mxu0
    %v979 = vadd.f32 %v875, %v978
    %v980 = vpop.f32.mrb[0].mxu0
    %v981 = vadd.f32 %v877, %v980
    %982 = vdwg.mxu0
    %v983 = vand.u32 %v45, 4294901760
    %984 = vmatprep.subr.mxu0 %v983
    %v985 = vand.u32 %v44, 4294901760
    %986 = vmatpush1.msra.mxu0 %v985
    %v987 = vand.u32 %v49, 4294901760
    %988 = vmatprep.subr.mxu0 %v987
    %v989 = vand.u32 %v48, 4294901760
    %990 = vmatpush1.msra.mxu0 %v989
    %v991 = vand.u32 %v53, 4294901760
    %992 = vmatprep.subr.mxu0 %v991
    %v993 = vand.u32 %v52, 4294901760
    %994 = vmatpush1.msra.mxu0 %v993
    %v995 = vand.u32 %v57, 4294901760
    %996 = vmatprep.subr.mxu0 %v995
    %v997 = vand.u32 %v56, 4294901760
    %998 = vmatpush1.msra.mxu0 %v997
    %v999 = vand.u32 %v61, 4294901760
    %1000 = vmatprep.subr.mxu0 %v999
    %v1001 = vand.u32 %v60, 4294901760
    %1002 = vmatpush1.msra.mxu0 %v1001
    %v1003 = vand.u32 %v65, 4294901760
    %1004 = vmatprep.subr.mxu0 %v1003
    %v1005 = vand.u32 %v64, 4294901760
    %1006 = vmatpush1.msra.mxu0 %v1005
    %v1007 = vand.u32 %v69, 4294901760
    %1008 = vmatprep.subr.mxu0 %v1007
    %v1009 = vand.u32 %v68, 4294901760
    %1010 = vmatpush1.msra.mxu0 %v1009
    %v1011 = vand.u32 %v73, 4294901760
    %1012 = vmatprep.subr.mxu0 %v1011
    %v1013 = vand.u32 %v72, 4294901760
    %1014 = vmatpush1.msra.mxu0 %v1013
    %v1015 = vand.u32 %v77, 4294901760
    %1016 = vmatprep.subr.mxu0 %v1015
    %v1017 = vand.u32 %v76, 4294901760
    %1018 = vmatpush1.msra.mxu0 %v1017
    %v1019 = vand.u32 %v81, 4294901760
    %1020 = vmatprep.subr.mxu0 %v1019
    %v1021 = vand.u32 %v80, 4294901760
    %1022 = vmatpush1.msra.mxu0 %v1021
    %v1023 = vand.u32 %v85, 4294901760
    %1024 = vmatprep.subr.mxu0 %v1023
    %v1025 = vand.u32 %v84, 4294901760
    %1026 = vmatpush1.msra.mxu0 %v1025
    %v1027 = vand.u32 %v89, 4294901760
    %1028 = vmatprep.subr.mxu0 %v1027
    %v1029 = vand.u32 %v88, 4294901760
    %1030 = vmatpush1.msra.mxu0 %v1029
    %v1031 = vand.u32 %v93, 4294901760
    %1032 = vmatprep.subr.mxu0 %v1031
    %v1033 = vand.u32 %v92, 4294901760
    %1034 = vmatpush1.msra.mxu0 %v1033
    %v1035 = vand.u32 %v97, 4294901760
    %1036 = vmatprep.subr.mxu0 %v1035
    %v1037 = vand.u32 %v96, 4294901760
    %1038 = vmatpush1.msra.mxu0 %v1037
    %v1039 = vand.u32 %v101, 4294901760
    %1040 = vmatprep.subr.mxu0 %v1039
    %v1041 = vand.u32 %v100, 4294901760
    %1042 = vmatpush1.msra.mxu0 %v1041
    %v1043 = vand.u32 %v105, 4294901760
    %1044 = vmatprep.subr.mxu0 %v1043
    %v1045 = vand.u32 %v104, 4294901760
    %1046 = vmatpush1.msra.mxu0 %v1045
    %1047 = vmatprep.subr.mxu0 0.0
    %1048 = vmatpush1.msra.mxu0 0.0
    %1049 = vmatprep.subr.mxu0 0.0
    %1050 = vmatpush1.msra.mxu0 0.0
    %1051 = vmatprep.subr.mxu0 0.0
    %1052 = vmatpush1.msra.mxu0 0.0
    %1053 = vmatprep.subr.mxu0 0.0
    %1054 = vmatpush1.msra.mxu0 0.0
    %1055 = vmatprep.subr.mxu0 0.0
    %1056 = vmatpush1.msra.mxu0 0.0
    %1057 = vmatprep.subr.mxu0 0.0
    %1058 = vmatpush1.msra.mxu0 0.0
    %1059 = vmatprep.subr.mxu0 0.0
    %1060 = vmatpush1.msra.mxu0 0.0
    %1061 = vmatprep.subr.mxu0 0.0
    %1062 = vmatpush1.msra.mxu0 0.0
    %1063 = vmatprep.subr.mxu0 0.0
    %1064 = vmatpush1.msra.mxu0 0.0
    %1065 = vmatprep.subr.mxu0 0.0
    %1066 = vmatpush1.msra.mxu0 0.0
    %1067 = vmatprep.subr.mxu0 0.0
    %1068 = vmatpush1.msra.mxu0 0.0
    %1069 = vmatprep.subr.mxu0 0.0
    %1070 = vmatpush1.msra.mxu0 0.0
    %1071 = vmatprep.subr.mxu0 0.0
    %1072 = vmatpush1.msra.mxu0 0.0
    %1073 = vmatprep.subr.mxu0 0.0
    %1074 = vmatpush1.msra.mxu0 0.0
    %1075 = vmatprep.subr.mxu0 0.0
    %1076 = vmatpush1.msra.mxu0 0.0
    %1077 = vmatprep.subr.mxu0 0.0
    %1078 = vmatpush1.msra.mxu0 0.0
    %1079 = vmatprep.mubr.f32.mxu0 0.0
    %v1080 = vand.u32 %v41, 4294901760
    %v1081 = vsub.f32 %v41, %v1080
    %v1082 = vand.u32 %v1081, 4294901760
    %v1083 = vsub.f32 %v1081, %v1082
    %v1084 = vand.u32 %v1083, 4294901760
    %1085 = vmatmul.mubr.f32.gmra.mrb[0].mxu0 %v1084
    %v1086 = vpop.f32.mrb[0].mxu0
    %v1087 = vadd.f32 %v119, %v1086
    %v1088 = vpop.f32.mrb[0].mxu0
    %v1089 = vadd.f32 %v123, %v1088
    %1090 = vdwg.mxu0
    %v1091 = vand.u32 %v45, 4294901760
    %v1092 = vsub.f32 %v45, %v1091
    %v1093 = vand.u32 %v1092, 4294901760
    %v1094 = vsub.f32 %v1092, %v1093
    %v1095 = vand.u32 %v1094, 4294901760
    %1096 = vmatprep.subr.mxu0 %v1095
    %v1097 = vand.u32 %v44, 4294901760
    %v1098 = vsub.f32 %v44, %v1097
    %v1099 = vand.u32 %v1098, 4294901760
    %v1100 = vsub.f32 %v1098, %v1099
    %v1101 = vand.u32 %v1100, 4294901760
    %1102 = vmatpush1.msra.mxu0 %v1101
    %v1103 = vand.u32 %v49, 4294901760
    %v1104 = vsub.f32 %v49, %v1103
    %v1105 = vand.u32 %v1104, 4294901760
    %v1106 = vsub.f32 %v1104, %v1105
    %v1107 = vand.u32 %v1106, 4294901760
    %1108 = vmatprep.subr.mxu0 %v1107
    %v1109 = vand.u32 %v48, 4294901760
    %v1110 = vsub.f32 %v48, %v1109
    %v1111 = vand.u32 %v1110, 4294901760
    %v1112 = vsub.f32 %v1110, %v1111
    %v1113 = vand.u32 %v1112, 4294901760
    %1114 = vmatpush1.msra.mxu0 %v1113
    %v1115 = vand.u32 %v53, 4294901760
    %v1116 = vsub.f32 %v53, %v1115
    %v1117 = vand.u32 %v1116, 4294901760
    %v1118 = vsub.f32 %v1116, %v1117
    %v1119 = vand.u32 %v1118, 4294901760
    %1120 = vmatprep.subr.mxu0 %v1119
    %v1121 = vand.u32 %v52, 4294901760
    %v1122 = vsub.f32 %v52, %v1121
    %v1123 = vand.u32 %v1122, 4294901760
    %v1124 = vsub.f32 %v1122, %v1123
    %v1125 = vand.u32 %v1124, 4294901760
    %1126 = vmatpush1.msra.mxu0 %v1125
    %v1127 = vand.u32 %v57, 4294901760
    %v1128 = vsub.f32 %v57, %v1127
    %v1129 = vand.u32 %v1128, 4294901760
    %v1130 = vsub.f32 %v1128, %v1129
    %v1131 = vand.u32 %v1130, 4294901760
    %1132 = vmatprep.subr.mxu0 %v1131
    %v1133 = vand.u32 %v56, 4294901760
    %v1134 = vsub.f32 %v56, %v1133
    %v1135 = vand.u32 %v1134, 4294901760
    %v1136 = vsub.f32 %v1134, %v1135
    %v1137 = vand.u32 %v1136, 4294901760
    %1138 = vmatpush1.msra.mxu0 %v1137
    %v1139 = vand.u32 %v61, 4294901760
    %v1140 = vsub.f32 %v61, %v1139
    %v1141 = vand.u32 %v1140, 4294901760
    %v1142 = vsub.f32 %v1140, %v1141
    %v1143 = vand.u32 %v1142, 4294901760
    %1144 = vmatprep.subr.mxu0 %v1143
    %v1145 = vand.u32 %v60, 4294901760
    %v1146 = vsub.f32 %v60, %v1145
    %v1147 = vand.u32 %v1146, 4294901760
    %v1148 = vsub.f32 %v1146, %v1147
    %v1149 = vand.u32 %v1148, 4294901760
    %1150 = vmatpush1.msra.mxu0 %v1149
    %v1151 = vand.u32 %v65, 4294901760
    %v1152 = vsub.f32 %v65, %v1151
    %v1153 = vand.u32 %v1152, 4294901760
    %v1154 = vsub.f32 %v1152, %v1153
    %v1155 = vand.u32 %v1154, 4294901760
    %1156 = vmatprep.subr.mxu0 %v1155
    %v1157 = vand.u32 %v64, 4294901760
    %v1158 = vsub.f32 %v64, %v1157
    %v1159 = vand.u32 %v1158, 4294901760
    %v1160 = vsub.f32 %v1158, %v1159
    %v1161 = vand.u32 %v1160, 4294901760
    %1162 = vmatpush1.msra.mxu0 %v1161
    %v1163 = vand.u32 %v69, 4294901760
    %v1164 = vsub.f32 %v69, %v1163
    %v1165 = vand.u32 %v1164, 4294901760
    %v1166 = vsub.f32 %v1164, %v1165
    %v1167 = vand.u32 %v1166, 4294901760
    %1168 = vmatprep.subr.mxu0 %v1167
    %v1169 = vand.u32 %v68, 4294901760
    %v1170 = vsub.f32 %v68, %v1169
    %v1171 = vand.u32 %v1170, 4294901760
    %v1172 = vsub.f32 %v1170, %v1171
    %v1173 = vand.u32 %v1172, 4294901760
    %1174 = vmatpush1.msra.mxu0 %v1173
    %v1175 = vand.u32 %v73, 4294901760
    %v1176 = vsub.f32 %v73, %v1175
    %v1177 = vand.u32 %v1176, 4294901760
    %v1178 = vsub.f32 %v1176, %v1177
    %v1179 = vand.u32 %v1178, 4294901760
    %1180 = vmatprep.subr.mxu0 %v1179
    %v1181 = vand.u32 %v72, 4294901760
    %v1182 = vsub.f32 %v72, %v1181
    %v1183 = vand.u32 %v1182, 4294901760
    %v1184 = vsub.f32 %v1182, %v1183
    %v1185 = vand.u32 %v1184, 4294901760
    %1186 = vmatpush1.msra.mxu0 %v1185
    %v1187 = vand.u32 %v77, 4294901760
    %v1188 = vsub.f32 %v77, %v1187
    %v1189 = vand.u32 %v1188, 4294901760
    %v1190 = vsub.f32 %v1188, %v1189
    %v1191 = vand.u32 %v1190, 4294901760
    %1192 = vmatprep.subr.mxu0 %v1191
    %v1193 = vand.u32 %v76, 4294901760
    %v1194 = vsub.f32 %v76, %v1193
    %v1195 = vand.u32 %v1194, 4294901760
    %v1196 = vsub.f32 %v1194, %v1195
    %v1197 = vand.u32 %v1196, 4294901760
    %1198 = vmatpush1.msra.mxu0 %v1197
    %v1199 = vand.u32 %v81, 4294901760
    %v1200 = vsub.f32 %v81, %v1199
    %v1201 = vand.u32 %v1200, 4294901760
    %v1202 = vsub.f32 %v1200, %v1201
    %v1203 = vand.u32 %v1202, 4294901760
    %1204 = vmatprep.subr.mxu0 %v1203
    %v1205 = vand.u32 %v80, 4294901760
    %v1206 = vsub.f32 %v80, %v1205
    %v1207 = vand.u32 %v1206, 4294901760
    %v1208 = vsub.f32 %v1206, %v1207
    %v1209 = vand.u32 %v1208, 4294901760
    %1210 = vmatpush1.msra.mxu0 %v1209
    %v1211 = vand.u32 %v85, 4294901760
    %v1212 = vsub.f32 %v85, %v1211
    %v1213 = vand.u32 %v1212, 4294901760
    %v1214 = vsub.f32 %v1212, %v1213
    %v1215 = vand.u32 %v1214, 4294901760
    %1216 = vmatprep.subr.mxu0 %v1215
    %v1217 = vand.u32 %v84, 4294901760
    %v1218 = vsub.f32 %v84, %v1217
    %v1219 = vand.u32 %v1218, 4294901760
    %v1220 = vsub.f32 %v1218, %v1219
    %v1221 = vand.u32 %v1220, 4294901760
    %1222 = vmatpush1.msra.mxu0 %v1221
    %v1223 = vand.u32 %v89, 4294901760
    %v1224 = vsub.f32 %v89, %v1223
    %v1225 = vand.u32 %v1224, 4294901760
    %v1226 = vsub.f32 %v1224, %v1225
    %v1227 = vand.u32 %v1226, 4294901760
    %1228 = vmatprep.subr.mxu0 %v1227
    %v1229 = vand.u32 %v88, 4294901760
    %v1230 = vsub.f32 %v88, %v1229
    %v1231 = vand.u32 %v1230, 4294901760
    %v1232 = vsub.f32 %v1230, %v1231
    %v1233 = vand.u32 %v1232, 4294901760
    %1234 = vmatpush1.msra.mxu0 %v1233
    %v1235 = vand.u32 %v93, 4294901760
    %v1236 = vsub.f32 %v93, %v1235
    %v1237 = vand.u32 %v1236, 4294901760
    %v1238 = vsub.f32 %v1236, %v1237
    %v1239 = vand.u32 %v1238, 4294901760
    %1240 = vmatprep.subr.mxu0 %v1239
    %v1241 = vand.u32 %v92, 4294901760
    %v1242 = vsub.f32 %v92, %v1241
    %v1243 = vand.u32 %v1242, 4294901760
    %v1244 = vsub.f32 %v1242, %v1243
    %v1245 = vand.u32 %v1244, 4294901760
    %1246 = vmatpush1.msra.mxu0 %v1245
    %v1247 = vand.u32 %v97, 4294901760
    %v1248 = vsub.f32 %v97, %v1247
    %v1249 = vand.u32 %v1248, 4294901760
    %v1250 = vsub.f32 %v1248, %v1249
    %v1251 = vand.u32 %v1250, 4294901760
    %1252 = vmatprep.subr.mxu0 %v1251
    %v1253 = vand.u32 %v96, 4294901760
    %v1254 = vsub.f32 %v96, %v1253
    %v1255 = vand.u32 %v1254, 4294901760
    %v1256 = vsub.f32 %v1254, %v1255
    %v1257 = vand.u32 %v1256, 4294901760
    %1258 = vmatpush1.msra.mxu0 %v1257
    %v1259 = vand.u32 %v101, 4294901760
    %v1260 = vsub.f32 %v101, %v1259
    %v1261 = vand.u32 %v1260, 4294901760
    %v1262 = vsub.f32 %v1260, %v1261
    %v1263 = vand.u32 %v1262, 4294901760
    %1264 = vmatprep.subr.mxu0 %v1263
    %v1265 = vand.u32 %v100, 4294901760
    %v1266 = vsub.f32 %v100, %v1265
    %v1267 = vand.u32 %v1266, 4294901760
    %v1268 = vsub.f32 %v1266, %v1267
    %v1269 = vand.u32 %v1268, 4294901760
    %1270 = vmatpush1.msra.mxu0 %v1269
    %v1271 = vand.u32 %v105, 4294901760
    %v1272 = vsub.f32 %v105, %v1271
    %v1273 = vand.u32 %v1272, 4294901760
    %v1274 = vsub.f32 %v1272, %v1273
    %v1275 = vand.u32 %v1274, 4294901760
    %1276 = vmatprep.subr.mxu0 %v1275
    %v1277 = vand.u32 %v104, 4294901760
    %v1278 = vsub.f32 %v104, %v1277
    %v1279 = vand.u32 %v1278, 4294901760
    %v1280 = vsub.f32 %v1278, %v1279
    %v1281 = vand.u32 %v1280, 4294901760
    %1282 = vmatpush1.msra.mxu0 %v1281
    %1283 = vmatprep.subr.mxu0 0.0
    %1284 = vmatpush1.msra.mxu0 0.0
    %1285 = vmatprep.subr.mxu0 0.0
    %1286 = vmatpush1.msra.mxu0 0.0
    %1287 = vmatprep.subr.mxu0 0.0
    %1288 = vmatpush1.msra.mxu0 0.0
    %1289 = vmatprep.subr.mxu0 0.0
    %1290 = vmatpush1.msra.mxu0 0.0
    %1291 = vmatprep.subr.mxu0 0.0
    %1292 = vmatpush1.msra.mxu0 0.0
    %1293 = vmatprep.subr.mxu0 0.0
    %1294 = vmatpush1.msra.mxu0 0.0
    %1295 = vmatprep.subr.mxu0 0.0
    %1296 = vmatpush1.msra.mxu0 0.0
    %1297 = vmatprep.subr.mxu0 0.0
    %1298 = vmatpush1.msra.mxu0 0.0
    %1299 = vmatprep.subr.mxu0 0.0
    %1300 = vmatpush1.msra.mxu0 0.0
    %1301 = vmatprep.subr.mxu0 0.0
    %1302 = vmatpush1.msra.mxu0 0.0
    %1303 = vmatprep.subr.mxu0 0.0
    %1304 = vmatpush1.msra.mxu0 0.0
    %1305 = vmatprep.subr.mxu0 0.0
    %1306 = vmatpush1.msra.mxu0 0.0
    %1307 = vmatprep.subr.mxu0 0.0
    %1308 = vmatpush1.msra.mxu0 0.0
    %1309 = vmatprep.subr.mxu0 0.0
    %1310 = vmatpush1.msra.mxu0 0.0
    %1311 = vmatprep.subr.mxu0 0.0
    %1312 = vmatpush1.msra.mxu0 0.0
    %1313 = vmatprep.subr.mxu0 0.0
    %1314 = vmatpush1.msra.mxu0 0.0
    %1315 = vmatprep.mubr.f32.mxu0 0.0
    %v1316 = vand.u32 %v41, 4294901760
    %1317 = vmatmul.mubr.f32.gmra.mrb[0].mxu0 %v1316
    %v1318 = vpop.f32.mrb[0].mxu0
    %v1319 = vadd.f32 %v1087, %v1318
    %v1320 = vpop.f32.mrb[0].mxu0
    %v1321 = vadd.f32 %v1089, %v1320
    %1322 = vdwg.mxu0
    %v1323 = vand.u32 %v45, 4294901760
    %v1324 = vsub.f32 %v45, %v1323
    %1325 = vmatprep.subr.mxu0 %v1324
    %v1326 = vand.u32 %v44, 4294901760
    %v1327 = vsub.f32 %v44, %v1326
    %1328 = vmatpush1.msra.mxu0 %v1327
    %v1329 = vand.u32 %v49, 4294901760
    %v1330 = vsub.f32 %v49, %v1329
    %1331 = vmatprep.subr.mxu0 %v1330
    %v1332 = vand.u32 %v48, 4294901760
    %v1333 = vsub.f32 %v48, %v1332
    %1334 = vmatpush1.msra.mxu0 %v1333
    %v1335 = vand.u32 %v53, 4294901760
    %v1336 = vsub.f32 %v53, %v1335
    %1337 = vmatprep.subr.mxu0 %v1336
    %v1338 = vand.u32 %v52, 4294901760
    %v1339 = vsub.f32 %v52, %v1338
    %1340 = vmatpush1.msra.mxu0 %v1339
    %v1341 = vand.u32 %v57, 4294901760
    %v1342 = vsub.f32 %v57, %v1341
    %1343 = vmatprep.subr.mxu0 %v1342
    %v1344 = vand.u32 %v56, 4294901760
    %v1345 = vsub.f32 %v56, %v1344
    %1346 = vmatpush1.msra.mxu0 %v1345
    %v1347 = vand.u32 %v61, 4294901760
    %v1348 = vsub.f32 %v61, %v1347
    %1349 = vmatprep.subr.mxu0 %v1348
    %v1350 = vand.u32 %v60, 4294901760
    %v1351 = vsub.f32 %v60, %v1350
    %1352 = vmatpush1.msra.mxu0 %v1351
    %v1353 = vand.u32 %v65, 4294901760
    %v1354 = vsub.f32 %v65, %v1353
    %1355 = vmatprep.subr.mxu0 %v1354
    %v1356 = vand.u32 %v64, 4294901760
    %v1357 = vsub.f32 %v64, %v1356
    %1358 = vmatpush1.msra.mxu0 %v1357
    %v1359 = vand.u32 %v69, 4294901760
    %v1360 = vsub.f32 %v69, %v1359
    %1361 = vmatprep.subr.mxu0 %v1360
    %v1362 = vand.u32 %v68, 4294901760
    %v1363 = vsub.f32 %v68, %v1362
    %1364 = vmatpush1.msra.mxu0 %v1363
    %v1365 = vand.u32 %v73, 4294901760
    %v1366 = vsub.f32 %v73, %v1365
    %1367 = vmatprep.subr.mxu0 %v1366
    %v1368 = vand.u32 %v72, 4294901760
    %v1369 = vsub.f32 %v72, %v1368
    %1370 = vmatpush1.msra.mxu0 %v1369
    %v1371 = vand.u32 %v77, 4294901760
    %v1372 = vsub.f32 %v77, %v1371
    %1373 = vmatprep.subr.mxu0 %v1372
    %v1374 = vand.u32 %v76, 4294901760
    %v1375 = vsub.f32 %v76, %v1374
    %1376 = vmatpush1.msra.mxu0 %v1375
    %v1377 = vand.u32 %v81, 4294901760
    %v1378 = vsub.f32 %v81, %v1377
    %1379 = vmatprep.subr.mxu0 %v1378
    %v1380 = vand.u32 %v80, 4294901760
    %v1381 = vsub.f32 %v80, %v1380
    %1382 = vmatpush1.msra.mxu0 %v1381
    %v1383 = vand.u32 %v85, 4294901760
    %v1384 = vsub.f32 %v85, %v1383
    %1385 = vmatprep.subr.mxu0 %v1384
    %v1386 = vand.u32 %v84, 4294901760
    %v1387 = vsub.f32 %v84, %v1386
    %1388 = vmatpush1.msra.mxu0 %v1387
    %v1389 = vand.u32 %v89, 4294901760
    %v1390 = vsub.f32 %v89, %v1389
    %1391 = vmatprep.subr.mxu0 %v1390
    %v1392 = vand.u32 %v88, 4294901760
    %v1393 = vsub.f32 %v88, %v1392
    %1394 = vmatpush1.msra.mxu0 %v1393
    %v1395 = vand.u32 %v93, 4294901760
    %v1396 = vsub.f32 %v93, %v1395
    %1397 = vmatprep.subr.mxu0 %v1396
    %v1398 = vand.u32 %v92, 4294901760
    %v1399 = vsub.f32 %v92, %v1398
    %1400 = vmatpush1.msra.mxu0 %v1399
    %v1401 = vand.u32 %v97, 4294901760
    %v1402 = vsub.f32 %v97, %v1401
    %1403 = vmatprep.subr.mxu0 %v1402
    %v1404 = vand.u32 %v96, 4294901760
    %v1405 = vsub.f32 %v96, %v1404
    %1406 = vmatpush1.msra.mxu0 %v1405
    %v1407 = vand.u32 %v101, 4294901760
    %v1408 = vsub.f32 %v101, %v1407
    %1409 = vmatprep.subr.mxu0 %v1408
    %v1410 = vand.u32 %v100, 4294901760
    %v1411 = vsub.f32 %v100, %v1410
    %1412 = vmatpush1.msra.mxu0 %v1411
    %v1413 = vand.u32 %v105, 4294901760
    %v1414 = vsub.f32 %v105, %v1413
    %1415 = vmatprep.subr.mxu0 %v1414
    %v1416 = vand.u32 %v104, 4294901760
    %v1417 = vsub.f32 %v104, %v1416
    %1418 = vmatpush1.msra.mxu0 %v1417
    %1419 = vmatprep.subr.mxu0 0.0
    %1420 = vmatpush1.msra.mxu0 0.0
    %1421 = vmatprep.subr.mxu0 0.0
    %1422 = vmatpush1.msra.mxu0 0.0
    %1423 = vmatprep.subr.mxu0 0.0
    %1424 = vmatpush1.msra.mxu0 0.0
    %1425 = vmatprep.subr.mxu0 0.0
    %1426 = vmatpush1.msra.mxu0 0.0
    %1427 = vmatprep.subr.mxu0 0.0
    %1428 = vmatpush1.msra.mxu0 0.0
    %1429 = vmatprep.subr.mxu0 0.0
    %1430 = vmatpush1.msra.mxu0 0.0
    %1431 = vmatprep.subr.mxu0 0.0
    %1432 = vmatpush1.msra.mxu0 0.0
    %1433 = vmatprep.subr.mxu0 0.0
    %1434 = vmatpush1.msra.mxu0 0.0
    %1435 = vmatprep.subr.mxu0 0.0
    %1436 = vmatpush1.msra.mxu0 0.0
    %1437 = vmatprep.subr.mxu0 0.0
    %1438 = vmatpush1.msra.mxu0 0.0
    %1439 = vmatprep.subr.mxu0 0.0
    %1440 = vmatpush1.msra.mxu0 0.0
    %1441 = vmatprep.subr.mxu0 0.0
    %1442 = vmatpush1.msra.mxu0 0.0
    %1443 = vmatprep.subr.mxu0 0.0
    %1444 = vmatpush1.msra.mxu0 0.0
    %1445 = vmatprep.subr.mxu0 0.0
    %1446 = vmatpush1.msra.mxu0 0.0
    %1447 = vmatprep.subr.mxu0 0.0
    %1448 = vmatpush1.msra.mxu0 0.0
    %1449 = vmatprep.subr.mxu0 0.0
    %1450 = vmatpush1.msra.mxu0 0.0
    %1451 = vmatprep.mubr.f32.mxu0 0.0
    %v1452 = vand.u32 %v41, 4294901760
    %v1453 = vsub.f32 %v41, %v1452
    %1454 = vmatmul.mubr.f32.gmra.mrb[0].mxu0 %v1453
    %v1455 = vpop.f32.mrb[0].mxu0
    %v1456 = vadd.f32 %v1319, %v1455
    %v1457 = vpop.f32.mrb[0].mxu0
    %v1458 = vadd.f32 %v1321, %v1457
    %1459 = vdwg.mxu0
    %v1460 = vand.u32 %v45, 4294901760
    %1461 = vmatprep.subr.mxu0 %v1460
    %v1462 = vand.u32 %v44, 4294901760
    %1463 = vmatpush1.msra.mxu0 %v1462
    %v1464 = vand.u32 %v49, 4294901760
    %1465 = vmatprep.subr.mxu0 %v1464
    %v1466 = vand.u32 %v48, 4294901760
    %1467 = vmatpush1.msra.mxu0 %v1466
    %v1468 = vand.u32 %v53, 4294901760
    %1469 = vmatprep.subr.mxu0 %v1468
    %v1470 = vand.u32 %v52, 4294901760
    %1471 = vmatpush1.msra.mxu0 %v1470
    %v1472 = vand.u32 %v57, 4294901760
    %1473 = vmatprep.subr.mxu0 %v1472
    %v1474 = vand.u32 %v56, 4294901760
    %1475 = vmatpush1.msra.mxu0 %v1474
    %v1476 = vand.u32 %v61, 4294901760
    %1477 = vmatprep.subr.mxu0 %v1476
    %v1478 = vand.u32 %v60, 4294901760
    %1479 = vmatpush1.msra.mxu0 %v1478
    %v1480 = vand.u32 %v65, 4294901760
    %1481 = vmatprep.subr.mxu0 %v1480
    %v1482 = vand.u32 %v64, 4294901760
    %1483 = vmatpush1.msra.mxu0 %v1482
    %v1484 = vand.u32 %v69, 4294901760
    %1485 = vmatprep.subr.mxu0 %v1484
    %v1486 = vand.u32 %v68, 4294901760
    %1487 = vmatpush1.msra.mxu0 %v1486
    %v1488 = vand.u32 %v73, 4294901760
    %1489 = vmatprep.subr.mxu0 %v1488
    %v1490 = vand.u32 %v72, 4294901760
    %1491 = vmatpush1.msra.mxu0 %v1490
    %v1492 = vand.u32 %v77, 4294901760
    %1493 = vmatprep.subr.mxu0 %v1492
    %v1494 = vand.u32 %v76, 4294901760
    %1495 = vmatpush1.msra.mxu0 %v1494
    %v1496 = vand.u32 %v81, 4294901760
    %1497 = vmatprep.subr.mxu0 %v1496
    %v1498 = vand.u32 %v80, 4294901760
    %1499 = vmatpush1.msra.mxu0 %v1498
    %v1500 = vand.u32 %v85, 4294901760
    %1501 = vmatprep.subr.mxu0 %v1500
    %v1502 = vand.u32 %v84, 4294901760
    %1503 = vmatpush1.msra.mxu0 %v1502
    %v1504 = vand.u32 %v89, 4294901760
    %1505 = vmatprep.subr.mxu0 %v1504
    %v1506 = vand.u32 %v88, 4294901760
    %1507 = vmatpush1.msra.mxu0 %v1506
    %v1508 = vand.u32 %v93, 4294901760
    %1509 = vmatprep.subr.mxu0 %v1508
    %v1510 = vand.u32 %v92, 4294901760
    %1511 = vmatpush1.msra.mxu0 %v1510
    %v1512 = vand.u32 %v97, 4294901760
    %1513 = vmatprep.subr.mxu0 %v1512
    %v1514 = vand.u32 %v96, 4294901760
    %1515 = vmatpush1.msra.mxu0 %v1514
    %v1516 = vand.u32 %v101, 4294901760
    %1517 = vmatprep.subr.mxu0 %v1516
    %v1518 = vand.u32 %v100, 4294901760
    %1519 = vmatpush1.msra.mxu0 %v1518
    %v1520 = vand.u32 %v105, 4294901760
    %1521 = vmatprep.subr.mxu0 %v1520
    %v1522 = vand.u32 %v104, 4294901760
    %1523 = vmatpush1.msra.mxu0 %v1522
    %1524 = vmatprep.subr.mxu0 0.0
    %1525 = vmatpush1.msra.mxu0 0.0
    %1526 = vmatprep.subr.mxu0 0.0
    %1527 = vmatpush1.msra.mxu0 0.0
    %1528 = vmatprep.subr.mxu0 0.0
    %1529 = vmatpush1.msra.mxu0 0.0
    %1530 = vmatprep.subr.mxu0 0.0
    %1531 = vmatpush1.msra.mxu0 0.0
    %1532 = vmatprep.subr.mxu0 0.0
    %1533 = vmatpush1.msra.mxu0 0.0
    %1534 = vmatprep.subr.mxu0 0.0
    %1535 = vmatpush1.msra.mxu0 0.0
    %1536 = vmatprep.subr.mxu0 0.0
    %1537 = vmatpush1.msra.mxu0 0.0
    %1538 = vmatprep.subr.mxu0 0.0
    %1539 = vmatpush1.msra.mxu0 0.0
    %1540 = vmatprep.subr.mxu0 0.0
    %1541 = vmatpush1.msra.mxu0 0.0
    %1542 = vmatprep.subr.mxu0 0.0
    %1543 = vmatpush1.msra.mxu0 0.0
    %1544 = vmatprep.subr.mxu0 0.0
    %1545 = vmatpush1.msra.mxu0 0.0
    %1546 = vmatprep.subr.mxu0 0.0
    %1547 = vmatpush1.msra.mxu0 0.0
    %1548 = vmatprep.subr.mxu0 0.0
    %1549 = vmatpush1.msra.mxu0 0.0
    %1550 = vmatprep.subr.mxu0 0.0
    %1551 = vmatpush1.msra.mxu0 0.0
    %1552 = vmatprep.subr.mxu0 0.0
    %1553 = vmatpush1.msra.mxu0 0.0
    %1554 = vmatprep.subr.mxu0 0.0
    %1555 = vmatpush1.msra.mxu0 0.0
    %1556 = vmatprep.mubr.f32.mxu0 0.0
    %v1557 = vand.u32 %v41, 4294901760
    %v1558 = vsub.f32 %v41, %v1557
    %v1559 = vand.u32 %v1558, 4294901760
    %1560 = vmatmul.mubr.f32.gmra.mrb[0].mxu0 %v1559
    %v1561 = vpop.f32.mrb[0].mxu0
    %v1562 = vadd.f32 %v1456, %v1561
    %v1563 = vpop.f32.mrb[0].mxu0
    %v1564 = vadd.f32 %v1458, %v1563
    %1565 = vdwg.mxu0
    %v1566 = vand.u32 %v45, 4294901760
    %v1567 = vsub.f32 %v45, %v1566
    %v1568 = vand.u32 %v1567, 4294901760
    %1569 = vmatprep.subr.mxu0 %v1568
    %v1570 = vand.u32 %v44, 4294901760
    %v1571 = vsub.f32 %v44, %v1570
    %v1572 = vand.u32 %v1571, 4294901760
    %1573 = vmatpush1.msra.mxu0 %v1572
    %v1574 = vand.u32 %v49, 4294901760
    %v1575 = vsub.f32 %v49, %v1574
    %v1576 = vand.u32 %v1575, 4294901760
    %1577 = vmatprep.subr.mxu0 %v1576
    %v1578 = vand.u32 %v48, 4294901760
    %v1579 = vsub.f32 %v48, %v1578
    %v1580 = vand.u32 %v1579, 4294901760
    %1581 = vmatpush1.msra.mxu0 %v1580
    %v1582 = vand.u32 %v53, 4294901760
    %v1583 = vsub.f32 %v53, %v1582
    %v1584 = vand.u32 %v1583, 4294901760
    %1585 = vmatprep.subr.mxu0 %v1584
    %v1586 = vand.u32 %v52, 4294901760
    %v1587 = vsub.f32 %v52, %v1586
    %v1588 = vand.u32 %v1587, 4294901760
    %1589 = vmatpush1.msra.mxu0 %v1588
    %v1590 = vand.u32 %v57, 4294901760
    %v1591 = vsub.f32 %v57, %v1590
    %v1592 = vand.u32 %v1591, 4294901760
    %1593 = vmatprep.subr.mxu0 %v1592
    %v1594 = vand.u32 %v56, 4294901760
    %v1595 = vsub.f32 %v56, %v1594
    %v1596 = vand.u32 %v1595, 4294901760
    %1597 = vmatpush1.msra.mxu0 %v1596
    %v1598 = vand.u32 %v61, 4294901760
    %v1599 = vsub.f32 %v61, %v1598
    %v1600 = vand.u32 %v1599, 4294901760
    %1601 = vmatprep.subr.mxu0 %v1600
    %v1602 = vand.u32 %v60, 4294901760
    %v1603 = vsub.f32 %v60, %v1602
    %v1604 = vand.u32 %v1603, 4294901760
    %1605 = vmatpush1.msra.mxu0 %v1604
    %v1606 = vand.u32 %v65, 4294901760
    %v1607 = vsub.f32 %v65, %v1606
    %v1608 = vand.u32 %v1607, 4294901760
    %1609 = vmatprep.subr.mxu0 %v1608
    %v1610 = vand.u32 %v64, 4294901760
    %v1611 = vsub.f32 %v64, %v1610
    %v1612 = vand.u32 %v1611, 4294901760
    %1613 = vmatpush1.msra.mxu0 %v1612
    %v1614 = vand.u32 %v69, 4294901760
    %v1615 = vsub.f32 %v69, %v1614
    %v1616 = vand.u32 %v1615, 4294901760
    %1617 = vmatprep.subr.mxu0 %v1616
    %v1618 = vand.u32 %v68, 4294901760
    %v1619 = vsub.f32 %v68, %v1618
    %v1620 = vand.u32 %v1619, 4294901760
    %1621 = vmatpush1.msra.mxu0 %v1620
    %v1622 = vand.u32 %v73, 4294901760
    %v1623 = vsub.f32 %v73, %v1622
    %v1624 = vand.u32 %v1623, 4294901760
    %1625 = vmatprep.subr.mxu0 %v1624
    %v1626 = vand.u32 %v72, 4294901760
    %v1627 = vsub.f32 %v72, %v1626
    %v1628 = vand.u32 %v1627, 4294901760
    %1629 = vmatpush1.msra.mxu0 %v1628
    %v1630 = vand.u32 %v77, 4294901760
    %v1631 = vsub.f32 %v77, %v1630
    %v1632 = vand.u32 %v1631, 4294901760
    %1633 = vmatprep.subr.mxu0 %v1632
    %v1634 = vand.u32 %v76, 4294901760
    %v1635 = vsub.f32 %v76, %v1634
    %v1636 = vand.u32 %v1635, 4294901760
    %1637 = vmatpush1.msra.mxu0 %v1636
    %v1638 = vand.u32 %v81, 4294901760
    %v1639 = vsub.f32 %v81, %v1638
    %v1640 = vand.u32 %v1639, 4294901760
    %1641 = vmatprep.subr.mxu0 %v1640
    %v1642 = vand.u32 %v80, 4294901760
    %v1643 = vsub.f32 %v80, %v1642
    %v1644 = vand.u32 %v1643, 4294901760
    %1645 = vmatpush1.msra.mxu0 %v1644
    %v1646 = vand.u32 %v85, 4294901760
    %v1647 = vsub.f32 %v85, %v1646
    %v1648 = vand.u32 %v1647, 4294901760
    %1649 = vmatprep.subr.mxu0 %v1648
    %v1650 = vand.u32 %v84, 4294901760
    %v1651 = vsub.f32 %v84, %v1650
    %v1652 = vand.u32 %v1651, 4294901760
    %1653 = vmatpush1.msra.mxu0 %v1652
    %v1654 = vand.u32 %v89, 4294901760
    %v1655 = vsub.f32 %v89, %v1654
    %v1656 = vand.u32 %v1655, 4294901760
    %1657 = vmatprep.subr.mxu0 %v1656
    %v1658 = vand.u32 %v88, 4294901760
    %v1659 = vsub.f32 %v88, %v1658
    %v1660 = vand.u32 %v1659, 4294901760
    %1661 = vmatpush1.msra.mxu0 %v1660
    %v1662 = vand.u32 %v93, 4294901760
    %v1663 = vsub.f32 %v93, %v1662
    %v1664 = vand.u32 %v1663, 4294901760
    %1665 = vmatprep.subr.mxu0 %v1664
    %v1666 = vand.u32 %v92, 4294901760
    %v1667 = vsub.f32 %v92, %v1666
    %v1668 = vand.u32 %v1667, 4294901760
    %1669 = vmatpush1.msra.mxu0 %v1668
    %v1670 = vand.u32 %v97, 4294901760
    %v1671 = vsub.f32 %v97, %v1670
    %v1672 = vand.u32 %v1671, 4294901760
    %1673 = vmatprep.subr.mxu0 %v1672
    %v1674 = vand.u32 %v96, 4294901760
    %v1675 = vsub.f32 %v96, %v1674
    %v1676 = vand.u32 %v1675, 4294901760
    %1677 = vmatpush1.msra.mxu0 %v1676
    %v1678 = vand.u32 %v101, 4294901760
    %v1679 = vsub.f32 %v101, %v1678
    %v1680 = vand.u32 %v1679, 4294901760
    %1681 = vmatprep.subr.mxu0 %v1680
    %v1682 = vand.u32 %v100, 4294901760
    %v1683 = vsub.f32 %v100, %v1682
    %v1684 = vand.u32 %v1683, 4294901760
    %1685 = vmatpush1.msra.mxu0 %v1684
    %v1686 = vand.u32 %v105, 4294901760
    %v1687 = vsub.f32 %v105, %v1686
    %v1688 = vand.u32 %v1687, 4294901760
    %1689 = vmatprep.subr.mxu0 %v1688
    %v1690 = vand.u32 %v104, 4294901760
    %v1691 = vsub.f32 %v104, %v1690
    %v1692 = vand.u32 %v1691, 4294901760
    %1693 = vmatpush1.msra.mxu0 %v1692
    %1694 = vmatprep.subr.mxu0 0.0
    %1695 = vmatpush1.msra.mxu0 0.0
    %1696 = vmatprep.subr.mxu0 0.0
    %1697 = vmatpush1.msra.mxu0 0.0
    %1698 = vmatprep.subr.mxu0 0.0
    %1699 = vmatpush1.msra.mxu0 0.0
    %1700 = vmatprep.subr.mxu0 0.0
    %1701 = vmatpush1.msra.mxu0 0.0
    %1702 = vmatprep.subr.mxu0 0.0
    %1703 = vmatpush1.msra.mxu0 0.0
    %1704 = vmatprep.subr.mxu0 0.0
    %1705 = vmatpush1.msra.mxu0 0.0
    %1706 = vmatprep.subr.mxu0 0.0
    %1707 = vmatpush1.msra.mxu0 0.0
    %1708 = vmatprep.subr.mxu0 0.0
    %1709 = vmatpush1.msra.mxu0 0.0
    %1710 = vmatprep.subr.mxu0 0.0
    %1711 = vmatpush1.msra.mxu0 0.0
    %1712 = vmatprep.subr.mxu0 0.0
    %1713 = vmatpush1.msra.mxu0 0.0
    %1714 = vmatprep.subr.mxu0 0.0
    %1715 = vmatpush1.msra.mxu0 0.0
    %1716 = vmatprep.subr.mxu0 0.0
    %1717 = vmatpush1.msra.mxu0 0.0
    %1718 = vmatprep.subr.mxu0 0.0
    %1719 = vmatpush1.msra.mxu0 0.0
    %1720 = vmatprep.subr.mxu0 0.0
    %1721 = vmatpush1.msra.mxu0 0.0
    %1722 = vmatprep.subr.mxu0 0.0
    %1723 = vmatpush1.msra.mxu0 0.0
    %1724 = vmatprep.subr.mxu0 0.0
    %1725 = vmatpush1.msra.mxu0 0.0
    %1726 = vmatprep.mubr.f32.mxu0 0.0
    %v1727 = vand.u32 %v41, 4294901760
    %1728 = vmatmul.mubr.f32.gmra.mrb[0].mxu0 %v1727
    %v1729 = vpop.f32.mrb[0].mxu0
    %v1730 = vadd.f32 %v1562, %v1729
    %v1731 = vpop.f32.mrb[0].mxu0
    %v1732 = vadd.f32 %v1564, %v1731
    %1733 = vdwg.mxu0
    %v1734 = vand.u32 %v45, 4294901760
    %1735 = vmatprep.subr.mxu0 %v1734
    %v1736 = vand.u32 %v44, 4294901760
    %1737 = vmatpush1.msra.mxu0 %v1736
    %v1738 = vand.u32 %v49, 4294901760
    %1739 = vmatprep.subr.mxu0 %v1738
    %v1740 = vand.u32 %v48, 4294901760
    %1741 = vmatpush1.msra.mxu0 %v1740
    %v1742 = vand.u32 %v53, 4294901760
    %1743 = vmatprep.subr.mxu0 %v1742
    %v1744 = vand.u32 %v52, 4294901760
    %1745 = vmatpush1.msra.mxu0 %v1744
    %v1746 = vand.u32 %v57, 4294901760
    %1747 = vmatprep.subr.mxu0 %v1746
    %v1748 = vand.u32 %v56, 4294901760
    %1749 = vmatpush1.msra.mxu0 %v1748
    %v1750 = vand.u32 %v61, 4294901760
    %1751 = vmatprep.subr.mxu0 %v1750
    %v1752 = vand.u32 %v60, 4294901760
    %1753 = vmatpush1.msra.mxu0 %v1752
    %v1754 = vand.u32 %v65, 4294901760
    %1755 = vmatprep.subr.mxu0 %v1754
    %v1756 = vand.u32 %v64, 4294901760
    %1757 = vmatpush1.msra.mxu0 %v1756
    %v1758 = vand.u32 %v69, 4294901760
    %1759 = vmatprep.subr.mxu0 %v1758
    %v1760 = vand.u32 %v68, 4294901760
    %1761 = vmatpush1.msra.mxu0 %v1760
    %v1762 = vand.u32 %v73, 4294901760
    %1763 = vmatprep.subr.mxu0 %v1762
    %v1764 = vand.u32 %v72, 4294901760
    %1765 = vmatpush1.msra.mxu0 %v1764
    %v1766 = vand.u32 %v77, 4294901760
    %1767 = vmatprep.subr.mxu0 %v1766
    %v1768 = vand.u32 %v76, 4294901760
    %1769 = vmatpush1.msra.mxu0 %v1768
    %v1770 = vand.u32 %v81, 4294901760
    %1771 = vmatprep.subr.mxu0 %v1770
    %v1772 = vand.u32 %v80, 4294901760
    %1773 = vmatpush1.msra.mxu0 %v1772
    %v1774 = vand.u32 %v85, 4294901760
    %1775 = vmatprep.subr.mxu0 %v1774
    %v1776 = vand.u32 %v84, 4294901760
    %1777 = vmatpush1.msra.mxu0 %v1776
    %v1778 = vand.u32 %v89, 4294901760
    %1779 = vmatprep.subr.mxu0 %v1778
    %v1780 = vand.u32 %v88, 4294901760
    %1781 = vmatpush1.msra.mxu0 %v1780
    %v1782 = vand.u32 %v93, 4294901760
    %1783 = vmatprep.subr.mxu0 %v1782
    %v1784 = vand.u32 %v92, 4294901760
    %1785 = vmatpush1.msra.mxu0 %v1784
    %v1786 = vand.u32 %v97, 4294901760
    %1787 = vmatprep.subr.mxu0 %v1786
    %v1788 = vand.u32 %v96, 4294901760
    %1789 = vmatpush1.msra.mxu0 %v1788
    %v1790 = vand.u32 %v101, 4294901760
    %1791 = vmatprep.subr.mxu0 %v1790
    %v1792 = vand.u32 %v100, 4294901760
    %1793 = vmatpush1.msra.mxu0 %v1792
    %v1794 = vand.u32 %v105, 4294901760
    %1795 = vmatprep.subr.mxu0 %v1794
    %v1796 = vand.u32 %v104, 4294901760
    %1797 = vmatpush1.msra.mxu0 %v1796
    %1798 = vmatprep.subr.mxu0 0.0
    %1799 = vmatpush1.msra.mxu0 0.0
    %1800 = vmatprep.subr.mxu0 0.0
    %1801 = vmatpush1.msra.mxu0 0.0
    %1802 = vmatprep.subr.mxu0 0.0
    %1803 = vmatpush1.msra.mxu0 0.0
    %1804 = vmatprep.subr.mxu0 0.0
    %1805 = vmatpush1.msra.mxu0 0.0
    %1806 = vmatprep.subr.mxu0 0.0
    %1807 = vmatpush1.msra.mxu0 0.0
    %1808 = vmatprep.subr.mxu0 0.0
    %1809 = vmatpush1.msra.mxu0 0.0
    %1810 = vmatprep.subr.mxu0 0.0
    %1811 = vmatpush1.msra.mxu0 0.0
    %1812 = vmatprep.subr.mxu0 0.0
    %1813 = vmatpush1.msra.mxu0 0.0
    %1814 = vmatprep.subr.mxu0 0.0
    %1815 = vmatpush1.msra.mxu0 0.0
    %1816 = vmatprep.subr.mxu0 0.0
    %1817 = vmatpush1.msra.mxu0 0.0
    %1818 = vmatprep.subr.mxu0 0.0
    %1819 = vmatpush1.msra.mxu0 0.0
    %1820 = vmatprep.subr.mxu0 0.0
    %1821 = vmatpush1.msra.mxu0 0.0
    %1822 = vmatprep.subr.mxu0 0.0
    %1823 = vmatpush1.msra.mxu0 0.0
    %1824 = vmatprep.subr.mxu0 0.0
    %1825 = vmatpush1.msra.mxu0 0.0
    %1826 = vmatprep.subr.mxu0 0.0
    %1827 = vmatpush1.msra.mxu0 0.0
    %1828 = vmatprep.subr.mxu0 0.0
    %1829 = vmatpush1.msra.mxu0 0.0
    %1830 = vmatprep.mubr.f32.mxu0 0.0
    %v1831 = vand.u32 %v41, 4294901760
    %1832 = vmatmul.mubr.f32.gmra.mrb[0].mxu0 %v1831
    %v1833 = vpop.f32.mrb[0].mxu0
    %v1834 = vadd.f32 %v1730, %v1833
    %v1835 = vpop.f32.mrb[0].mxu0
    %v1836 = vadd.f32 %v1732, %v1835
    %1837 = vdwg.mxu0
    %v1842 = vcombine.low %v979, %v981
    %v1843 = vcombine.low %v1834, %v1836
    %v1845 = vunpack.c.l.s4 1983009808
    %v1846 = vunpack.c.0.s8 %v1845
    %v1847 = vlaneseq
    %v1848 = vshrl.u32 %v1847, 7
    %v1849 = vsub.s32 %v1846, %v1848
    %v1850 = vrot.slane %v1842, %v1849
    %v1852 = vunpack.c.l.s4 1983009808
    %v1853 = vunpack.c.0.s8 %v1852
    %v1854 = vlaneseq
    %v1855 = vshrl.u32 %v1854, 7
    %v1856 = vsub.s32 %v1853, %v1855
    %v1857 = vrot.slane %v1843, %v1856
    %v1858 = vcombine.low %v1850, %v1857
    %1860 = vst [vmem:[#allocation7] sm:$0xff] %v1858
    // Predicated region
    $region22: #{tpu_custom_call.1} parent=1 // pred_check
      _
    $region23: #{tpu_custom_call.1} parent=1 // pred_check_branch
      %1862 = sbr.rel (0) target = $region25
    $region24: #{tpu_custom_call.1} parent=1 // pred_region
      %s1864 = ssub.s32 128, 128
      %1865 = vsyncadd [#allocation4], %s1864
      %s1867 = sshll.u32 [#allocation7], 4
      %s1868 = int_to_ptr.vmem [resolvable:$true] %s1867
      %1870 = dma.vmem_to_hbm [thread:$0]  %s1868, 128, %s3, [#allocation4]
    $region25: #{tpu_custom_call.1} parent=1 // pred_fallthru
      _
    // Predicated region
    $region26: #{tpu_custom_call.1} parent=1 // pred_check
      _
    $region27: #{tpu_custom_call.1} parent=1 // pred_check_branch
      %1872 = sbr.rel (0) target = $region29
    $region28: #{tpu_custom_call.1} parent=1 // pred_region
      %1873 = dma.done [#allocation4], 128
    $region29: #{tpu_custom_call.1} parent=1 // pred_fallthru
      _
    %1874 = vsyncpa [#allocation3], 1
    %1875 = vsyncpa [#allocation6], 1
    %1876 = vsyncpa [#allocation4], 1

</llo_original>
